<compile_context>
chip_gen: v5e
topology: v5e:2x2
jax: 0.10.0
libtpu: 0.0.40
codegen_flags: <defaults>
</compile_context>

<pallas_src>
import jax
import jax.numpy as jnp
import numpy as np
from jax.experimental import pallas as pl
from jax.experimental.pallas import tpu as pltpu

# ----------------------------- configuration -------------------------------
N_IMG = 8                 # total images across all bags (sum of leng)
C_IN = 3                  # timm created with in_chans=3
H = W = 16
HW = H * W
KH = KW = 3
K_PATCH = C_IN * KH * KW  # 27
C_MID = 8                 # proxy conv-stem channels
FEAT = 256                # proxy for encoder.classifier.in_features
HID = 512                 # logits hidden width
LENG = (3, 5)             # per-bag image counts (static example)
NUM_BAGS = len(LENG)
DROP_RATE = 0.1           # dropout: identity in eval mode


# ------------------------------ fused kernel --------------------------------
def fused_kernel(patches_t_ref, bagm_ref, bagmt_ref,
                 w_conv_t_ref, b_conv_ref, w_enc_ref, b_enc_ref,
                 w_att_ref, b_att_ref, v_att_ref,
                 w_l1_ref, b_l1_ref, w_l2_ref, b_l2_ref,
                 o_ref):
    n_img = bagmt_ref.shape[0]
    n_tot = patches_t_ref.shape[1]
    hw = n_tot // n_img

    # ---- proxy encoder: conv3x3 (transposed im2col matmul) + ReLU ----------
    # conv_t = Wc^T @ patches^T  -> [C_MID, N*HW]  (lane-dense: 16 vregs)
    conv_t = jnp.dot(w_conv_t_ref[...], patches_t_ref[...],
                     preferred_element_type=jnp.float32)
    conv_t = jnp.maximum(conv_t + b_conv_ref[...], 0.0)

    # ---- global average pool over HW (lane-axis reduce) --------------------
    pooled_t = jnp.mean(conv_t.reshape(C_MID, n_img, hw), axis=-1)   # [C_MID, N]

    # ---- encoder fc -> FEAT (transposed-LHS matmul; no explicit relayout) --
    feats = jax.lax.dot_general(
        pooled_t, w_enc_ref[...],
        dimension_numbers=(((0,), (0,)), ((), ())),
        preferred_element_type=jnp.float32) + b_enc_ref[...]         # [N, FEAT]

    # ---- MLPAttentionNetwork: H = tanh(proj_w(x)); scores = proj_v(H) ------
    h = jnp.tanh(jnp.dot(feats.astype(jnp.bfloat16), w_att_ref[...],
                         preferred_element_type=jnp.float32)
                 + b_att_ref[...])                                   # [N, FEAT]
    # proj_v has out_features=1 -> VPU mul + lane reduce instead of MXU dot
    scores = jnp.sum(h * v_att_ref[...], axis=-1, keepdims=True)     # [N, 1]

    # ---- per-bag softmax over axis 0 (segment softmax via one-hot bags) ----
    mt = bagmt_ref[...]                                              # [N, NUM_BAGS]
    masked = jnp.where(mt > 0.5, scores, -1e30)                      # [N, NUM_BAGS]
    bag_max = jnp.max(masked, axis=0, keepdims=True)                 # [1, NUM_BAGS]
    row_max = jnp.sum(mt * bag_max, axis=1, keepdims=True)           # [N, 1]
    e = jnp.exp(scores - row_max)                                    # [N, 1]
    denom = jnp.sum(mt * e, axis=0, keepdims=True)                   # [1, NUM_BAGS]
    row_denom = jnp.sum(mt * denom, axis=1, keepdims=True)           # [N, 1]
    att = e * pl.reciprocal(row_denom, approx=True)                  # softmax weights

    # attn_x per bag = sum over bag rows of (score * feature)
    attn = jnp.dot(bagm_ref[...], att * feats,
                   preferred_element_type=jnp.float32)               # [NUM_BAGS, FEAT]

    # ---- logits head: Linear(FEAT,512) -> ReLU -> Dropout(eval) -> Linear(512,1)
    # TODO(synk): dropout is active only in training; eval-mode identity here.
    h1 = jnp.maximum(jnp.dot(attn.astype(jnp.bfloat16), w_l1_ref[...],
                             preferred_element_type=jnp.float32)
                     + b_l1_ref[...], 0.0)                           # [NUM_BAGS, HID]
    pred = jnp.sum(h1 * w_l2_ref[...], axis=-1, keepdims=True) + b_l2_ref[...]
    o_ref[...] = pred.astype(o_ref.dtype)                            # [NUM_BAGS, 1]


# ------------------------------- JAX glue -----------------------------------
def _full_spec(shape):
    """Whole-array block (grid=(1,)); everything fits comfortably in VMEM."""
    nd = len(shape)
    return pl.BlockSpec(shape, lambda i, nd=nd: (0,) * nd)


def extract_patches_t(x_nchw):
    """im2col, bf16, transposed: [N,C,H,W] -> [C*KH*KW, N*H*W] (3x3, pad=1)."""
    x = jnp.transpose(x_nchw, (0, 2, 3, 1)).astype(jnp.bfloat16)     # NHWC bf16
    p = jax.lax.conv_general_dilated_patches(
        x, filter_shape=(KH, KW), window_strides=(1, 1),
        padding=((1, 1), (1, 1)),
        dimension_numbers=("NHWC", "HWIO", "NHWC"))                  # [N,H,W,C*9]
    # layout plumbing only (lane-dense K_PATCH x (N*HW) slab for the kernel)
    return p.reshape(-1, K_PATCH).T                                  # [27, N*HW]


def make_bag_matrices(leng, n_total):
    """One-hot bag membership: m [NUM_BAGS, N] and its transpose [N, NUM_BAGS]."""
    assert sum(leng) == n_total, "bags must cover every image exactly once"
    m = np.zeros((len(leng), n_total), np.float32)
    done = 0
    for b, l in enumerate(leng):
        m[b, done:done + l] = 1.0
        done += l
    m = jnp.asarray(m)
    return m, jnp.asarray(m.T)


def att_efficient_forward(x, bag_m, bag_mt, params):
    """x: [N_IMG, C_IN, H, W] (NCHW); bag matrices encode `leng`."""
    patches_t = extract_patches_t(x)                                 # [27, N*HW] bf16
    args = (patches_t, bag_m, bag_mt,
            params["w_conv_t"], params["b_conv"],
            params["w_enc"], params["b_enc"],
            params["w_att"], params["b_att"], params["v_att"],
            params["w_l1"], params["b_l1"],
            params["w_l2"], params["b_l2"])
    return pl.pallas_call(
        fused_kernel,
        out_shape=jax.ShapeDtypeStruct((NUM_BAGS, 1), jnp.float32),
        grid=(1,),
        in_specs=[_full_spec(a.shape) for a in args],
        out_specs=_full_spec((NUM_BAGS, 1)),
        compiler_params=pltpu.CompilerParams(
            dimension_semantics=("arbitrary",)),
    )(*args)


def init_params(key):
    """Deterministic proxy parameters. MXU weight matrices stored as bf16."""
    ks = jax.random.split(key, 12)
    p = {
        # proxy conv stem, transposed im2col layout [C_MID, C_IN*KH*KW]
        "w_conv_t": (0.05 * jax.random.normal(ks[0], (C_MID, K_PATCH), jnp.float32)
                     ).astype(jnp.bfloat16),
        "b_conv": 0.01 * jax.random.normal(ks[1], (C_MID, 1), jnp.float32),
        # proxy encoder fc -> FEAT (classifier replaced by Identity in the model)
        "w_enc": 0.05 * jax.random.normal(ks[2], (C_MID, FEAT), jnp.float32),
        "b_enc": 0.01 * jax.random.normal(ks[3], (1, FEAT), jnp.float32),
        # MLPAttentionNetwork
        "w_att": (0.05 * jax.random.normal(ks[4], (FEAT, FEAT), jnp.float32)
                  ).astype(jnp.bfloat16),
        "b_att": 0.01 * jax.random.normal(ks[5], (1, FEAT), jnp.float32),
        "v_att": 0.05 * jax.random.normal(ks[6], (1, FEAT), jnp.float32),
        # logits head
        "w_l1": (0.05 * jax.random.normal(ks[7], (FEAT, HID), jnp.float32)
                 ).astype(jnp.bfloat16),
        "b_l1": 0.01 * jax.random.normal(ks[8], (1, HID), jnp.float32),
        "w_l2": 0.05 * jax.random.normal(ks[9], (1, HID), jnp.float32),
        "b_l2": 0.01 * jax.random.normal(ks[10], (1, 1), jnp.float32),
    }
    return p


if __name__ == "__main__":
    key = jax.random.PRNGKey(0)
    k_img, k_par = jax.random.split(key)
    x = jax.random.normal(k_img, (N_IMG, C_IN, H, W), jnp.float32)   # NCHW
    params = init_params(k_par)
    bag_m, bag_mt = make_bag_matrices(LENG, N_IMG)                   # encodes leng

    out = jax.jit(att_efficient_forward)(x, bag_m, bag_mt, params)
    out = jax.block_until_ready(out)
    assert out.shape == (NUM_BAGS, 1), out.shape
    assert bool(jnp.all(jnp.isfinite(out)))
    print("KERNEL_OK")
</pallas_src>

<mosaic_0001>
module attributes {stable_mosaic.version = 11 : i64} {
  func.func @fused_kernel(%arg0: i32, %arg1: memref<27x2048xbf16, #tpu.memory_space<vmem>>, %arg2: memref<2x8xf32, #tpu.memory_space<vmem>>, %arg3: memref<8x2xf32, #tpu.memory_space<vmem>>, %arg4: memref<8x27xbf16, #tpu.memory_space<vmem>>, %arg5: memref<8x1xf32, #tpu.memory_space<vmem>>, %arg6: memref<8x256xf32, #tpu.memory_space<vmem>>, %arg7: memref<1x256xf32, #tpu.memory_space<vmem>>, %arg8: memref<256x256xbf16, #tpu.memory_space<vmem>>, %arg9: memref<1x256xf32, #tpu.memory_space<vmem>>, %arg10: memref<1x256xf32, #tpu.memory_space<vmem>>, %arg11: memref<256x512xbf16, #tpu.memory_space<vmem>>, %arg12: memref<1x512xf32, #tpu.memory_space<vmem>>, %arg13: memref<1x512xf32, #tpu.memory_space<vmem>>, %arg14: memref<1x1xf32, #tpu.memory_space<vmem>>, %arg15: memref<2x1xf32, #tpu.memory_space<vmem>>) attributes {dimension_semantics = [#tpu.dimension_semantics<arbitrary>], iteration_bounds = array<i64: 1>, scalar_prefetch = 0 : i64, scratch_operands = 0 : i64, tpu.core_type = #tpu.core_type<tc>, window_params = [{pipeline_mode = #tpu.pipeline_mode<synchronous>, transform_indices = @transform_0, window_bounds = array<i64: 27, 2048>}, {pipeline_mode = #tpu.pipeline_mode<synchronous>, transform_indices = @transform_1, window_bounds = array<i64: 2, 8>}, {pipeline_mode = #tpu.pipeline_mode<synchronous>, transform_indices = @transform_2, window_bounds = array<i64: 8, 2>}, {pipeline_mode = #tpu.pipeline_mode<synchronous>, transform_indices = @transform_3, window_bounds = array<i64: 8, 27>}, {pipeline_mode = #tpu.pipeline_mode<synchronous>, transform_indices = @transform_4, window_bounds = array<i64: 8, 1>}, {pipeline_mode = #tpu.pipeline_mode<synchronous>, transform_indices = @transform_5, window_bounds = array<i64: 8, 256>}, {pipeline_mode = #tpu.pipeline_mode<synchronous>, transform_indices = @transform_6, window_bounds = array<i64: 1, 256>}, {pipeline_mode = #tpu.pipeline_mode<synchronous>, transform_indices = @transform_7, window_bounds = array<i64: 256, 256>}, {pipeline_mode = #tpu.pipeline_mode<synchronous>, transform_indices = @transform_8, window_bounds = array<i64: 1, 256>}, {pipeline_mode = #tpu.pipeline_mode<synchronous>, transform_indices = @transform_9, window_bounds = array<i64: 1, 256>}, {pipeline_mode = #tpu.pipeline_mode<synchronous>, transform_indices = @transform_10, window_bounds = array<i64: 256, 512>}, {pipeline_mode = #tpu.pipeline_mode<synchronous>, transform_indices = @transform_11, window_bounds = array<i64: 1, 512>}, {pipeline_mode = #tpu.pipeline_mode<synchronous>, transform_indices = @transform_12, window_bounds = array<i64: 1, 512>}, {pipeline_mode = #tpu.pipeline_mode<synchronous>, transform_indices = @transform_13, window_bounds = array<i64: 1, 1>}, {pipeline_mode = #tpu.pipeline_mode<synchronous>, transform_indices = @transform_14, window_bounds = array<i64: 2, 1>}]} {
    %c0 = arith.constant 0 : index
    %c0_0 = arith.constant 0 : index
    %0 = vector.load %arg4[%c0, %c0_0] : memref<8x27xbf16, #tpu.memory_space<vmem>>, vector<8x27xbf16>
    %c0_1 = arith.constant 0 : index
    %c0_2 = arith.constant 0 : index
    %1 = vector.load %arg1[%c0_1, %c0_2] : memref<27x2048xbf16, #tpu.memory_space<vmem>>, vector<27x2048xbf16>
    %cst = arith.constant dense<0.000000e+00> : vector<8x2048xf32>
    %2 = tpu.matmul %0, %1, %cst {dimension_numbers = #tpu.dot_dimension_numbers<[1], [0], [0], [1], [0, 0, 1, 1], [], []>} : vector<8x27xbf16>, vector<27x2048xbf16>, vector<8x2048xf32> -> vector<8x2048xf32>
    %c0_3 = arith.constant 0 : index
    %c0_4 = arith.constant 0 : index
    %3 = vector.load %arg5[%c0_3, %c0_4] : memref<8x1xf32, #tpu.memory_space<vmem>>, vector<8x1xf32>
    %4 = vector.broadcast %3 : vector<8x1xf32> to vector<8x2048xf32>
    %5 = arith.addf %2, %4 : vector<8x2048xf32>
    %cst_5 = arith.constant 0.000000e+00 : f32
    %6 = vector.broadcast %cst_5 : f32 to vector<8x2048xf32>
    %7 = arith.maximumf %5, %6 : vector<8x2048xf32>
    %8 = vector.shape_cast %7 : vector<8x2048xf32> to vector<8x8x256xf32>
    %cst_6 = arith.constant dense<0.000000e+00> : vector<8x8xf32>
    %9 = vector.multi_reduction <add>, %8, %cst_6 [2] : vector<8x8x256xf32> to vector<8x8xf32>
    %cst_7 = arith.constant 2.560000e+02 : f32
    %10 = vector.broadcast %cst_7 : f32 to vector<8x8xf32>
    %11 = arith.divf %9, %10 : vector<8x8xf32>
    %c0_8 = arith.constant 0 : index
    %c0_9 = arith.constant 0 : index
    %12 = vector.load %arg6[%c0_8, %c0_9] : memref<8x256xf32, #tpu.memory_space<vmem>>, vector<8x256xf32>
    %cst_10 = arith.constant dense<0.000000e+00> : vector<8x256xf32>
    %13 = tpu.matmul %11, %12, %cst_10 {dimension_numbers = #tpu.dot_dimension_numbers<[0], [0], [1], [1], [0, 1, 1, 1], [], []>} : vector<8x8xf32>, vector<8x256xf32>, vector<8x256xf32> -> vector<8x256xf32>
    %c0_11 = arith.constant 0 : index
    %c0_12 = arith.constant 0 : index
    %14 = vector.load %arg7[%c0_11, %c0_12] : memref<1x256xf32, #tpu.memory_space<vmem>>, vector<1x256xf32>
    %15 = vector.broadcast %14 : vector<1x256xf32> to vector<8x256xf32>
    %16 = arith.addf %13, %15 : vector<8x256xf32>
    %17 = arith.truncf %16 : vector<8x256xf32> to vector<8x256xbf16>
    %c0_13 = arith.constant 0 : index
    %c0_14 = arith.constant 0 : index
    %18 = vector.load %arg8[%c0_13, %c0_14] : memref<256x256xbf16, #tpu.memory_space<vmem>>, vector<256x256xbf16>
    %cst_15 = arith.constant dense<0.000000e+00> : vector<8x256xf32>
    %19 = tpu.matmul %17, %18, %cst_15 {dimension_numbers = #tpu.dot_dimension_numbers<[1], [0], [0], [1], [0, 0, 1, 1], [], []>} : vector<8x256xbf16>, vector<256x256xbf16>, vector<8x256xf32> -> vector<8x256xf32>
    %c0_16 = arith.constant 0 : index
    %c0_17 = arith.constant 0 : index
    %20 = vector.load %arg9[%c0_16, %c0_17] : memref<1x256xf32, #tpu.memory_space<vmem>>, vector<1x256xf32>
    %21 = vector.broadcast %20 : vector<1x256xf32> to vector<8x256xf32>
    %22 = arith.addf %19, %21 : vector<8x256xf32>
    %23 = math.tanh %22 : vector<8x256xf32>
    %c0_18 = arith.constant 0 : index
    %c0_19 = arith.constant 0 : index
    %24 = vector.load %arg10[%c0_18, %c0_19] : memref<1x256xf32, #tpu.memory_space<vmem>>, vector<1x256xf32>
    %25 = vector.broadcast %24 : vector<1x256xf32> to vector<8x256xf32>
    %26 = arith.mulf %23, %25 : vector<8x256xf32>
    %cst_20 = arith.constant dense<0.000000e+00> : vector<8xf32>
    %27 = vector.multi_reduction <add>, %26, %cst_20 [1] : vector<8x256xf32> to vector<8xf32>
    %28 = vector.shape_cast %27 : vector<8xf32> to vector<8x1xf32>
    %c0_21 = arith.constant 0 : index
    %c0_22 = arith.constant 0 : index
    %29 = vector.load %arg3[%c0_21, %c0_22] : memref<8x2xf32, #tpu.memory_space<vmem>>, vector<8x2xf32>
    %cst_23 = arith.constant 5.000000e-01 : f32
    %30 = vector.broadcast %cst_23 : f32 to vector<8x2xf32>
    %31 = arith.cmpf ogt, %29, %30 : vector<8x2xf32>
    %cst_24 = arith.constant -1.000000e+30 : f32
    %32 = vector.shape_cast %28 : vector<8x1xf32> to vector<8x1xf32>
    %33 = vector.broadcast %32 : vector<8x1xf32> to vector<8x2xf32>
    %34 = vector.broadcast %cst_24 : f32 to vector<8x2xf32>
    %35 = arith.select %31, %33, %34 : vector<8x2xi1>, vector<8x2xf32>
    %cst_25 = arith.constant dense<0xFF800000> : vector<2xf32>
    %36 = vector.multi_reduction <maximumf>, %35, %cst_25 [0] : vector<8x2xf32> to vector<2xf32>
    %37 = vector.shape_cast %36 : vector<2xf32> to vector<1x2xf32>
    %38 = vector.broadcast %37 : vector<1x2xf32> to vector<8x2xf32>
    %39 = arith.mulf %29, %38 : vector<8x2xf32>
    %cst_26 = arith.constant dense<0.000000e+00> : vector<8xf32>
    %40 = vector.multi_reduction <add>, %39, %cst_26 [1] : vector<8x2xf32> to vector<8xf32>
    %41 = vector.shape_cast %40 : vector<8xf32> to vector<8x1xf32>
    %42 = arith.subf %28, %41 : vector<8x1xf32>
    %43 = math.exp %42 : vector<8x1xf32>
    %44 = vector.broadcast %43 : vector<8x1xf32> to vector<8x2xf32>
    %45 = arith.mulf %29, %44 : vector<8x2xf32>
    %cst_27 = arith.constant dense<0.000000e+00> : vector<2xf32>
    %46 = vector.multi_reduction <add>, %45, %cst_27 [0] : vector<8x2xf32> to vector<2xf32>
    %47 = vector.shape_cast %46 : vector<2xf32> to vector<1x2xf32>
    %48 = vector.broadcast %47 : vector<1x2xf32> to vector<8x2xf32>
    %49 = arith.mulf %29, %48 : vector<8x2xf32>
    %cst_28 = arith.constant dense<0.000000e+00> : vector<8xf32>
    %50 = vector.multi_reduction <add>, %49, %cst_28 [1] : vector<8x2xf32> to vector<8xf32>
    %51 = vector.shape_cast %50 : vector<8xf32> to vector<8x1xf32>
    %52 = tpu.reciprocal %51 {approx = true} : vector<8x1xf32> -> vector<8x1xf32>
    %53 = arith.mulf %43, %52 : vector<8x1xf32>
    %c0_29 = arith.constant 0 : index
    %c0_30 = arith.constant 0 : index
    %54 = vector.load %arg2[%c0_29, %c0_30] : memref<2x8xf32, #tpu.memory_space<vmem>>, vector<2x8xf32>
    %55 = vector.broadcast %53 : vector<8x1xf32> to vector<8x256xf32>
    %56 = arith.mulf %55, %16 : vector<8x256xf32>
    %cst_31 = arith.constant dense<0.000000e+00> : vector<2x256xf32>
    %57 = tpu.matmul %54, %56, %cst_31 {dimension_numbers = #tpu.dot_dimension_numbers<[1], [0], [0], [1], [0, 0, 1, 1], [], []>} : vector<2x8xf32>, vector<8x256xf32>, vector<2x256xf32> -> vector<2x256xf32>
    %58 = arith.truncf %57 : vector<2x256xf32> to vector<2x256xbf16>
    %c0_32 = arith.constant 0 : index
    %c0_33 = arith.constant 0 : index
    %59 = vector.load %arg11[%c0_32, %c0_33] : memref<256x512xbf16, #tpu.memory_space<vmem>>, vector<256x512xbf16>
    %cst_34 = arith.constant dense<0.000000e+00> : vector<2x512xf32>
    %60 = tpu.matmul %58, %59, %cst_34 {dimension_numbers = #tpu.dot_dimension_numbers<[1], [0], [0], [1], [0, 0, 1, 1], [], []>} : vector<2x256xbf16>, vector<256x512xbf16>, vector<2x512xf32> -> vector<2x512xf32>
    %c0_35 = arith.constant 0 : index
    %c0_36 = arith.constant 0 : index
    %61 = vector.load %arg12[%c0_35, %c0_36] : memref<1x512xf32, #tpu.memory_space<vmem>>, vector<1x512xf32>
    %62 = vector.broadcast %61 : vector<1x512xf32> to vector<2x512xf32>
    %63 = arith.addf %60, %62 : vector<2x512xf32>
    %cst_37 = arith.constant 0.000000e+00 : f32
    %64 = vector.broadcast %cst_37 : f32 to vector<2x512xf32>
    %65 = arith.maximumf %63, %64 : vector<2x512xf32>
    %c0_38 = arith.constant 0 : index
    %c0_39 = arith.constant 0 : index
    %66 = vector.load %arg13[%c0_38, %c0_39] : memref<1x512xf32, #tpu.memory_space<vmem>>, vector<1x512xf32>
    %67 = vector.broadcast %66 : vector<1x512xf32> to vector<2x512xf32>
    %68 = arith.mulf %65, %67 : vector<2x512xf32>
    %cst_40 = arith.constant dense<0.000000e+00> : vector<2xf32>
    %69 = vector.multi_reduction <add>, %68, %cst_40 [1] : vector<2x512xf32> to vector<2xf32>
    %70 = vector.shape_cast %69 : vector<2xf32> to vector<2x1xf32>
    %c0_41 = arith.constant 0 : index
    %c0_42 = arith.constant 0 : index
    %71 = vector.load %arg14[%c0_41, %c0_42] : memref<1x1xf32, #tpu.memory_space<vmem>>, vector<1x1xf32>
    %72 = vector.broadcast %71 : vector<1x1xf32> to vector<2x1xf32>
    %73 = arith.addf %70, %72 : vector<2x1xf32>
    %c0_43 = arith.constant 0 : index
    %c0_44 = arith.constant 0 : index
    %74 = vector.load %arg15[%c0_43, %c0_44] : memref<2x1xf32, #tpu.memory_space<vmem>>, vector<2x1xf32>
    tpu.vector_store %arg15[%c0_43, %c0_44], %73 {strides = array<i32>} : memref<2x1xf32, #tpu.memory_space<vmem>>, vector<2x1xf32>,
    return
  }
  func.func @transform_0(%arg0: i32) -> (i32, i32) {
    %c0_i32 = arith.constant 0 : i32
    %c0_i32_0 = arith.constant 0 : i32
    %c0_i32_1 = arith.constant 0 : i32
    return %c0_i32, %c0_i32_0 : i32, i32
  }
  func.func @transform_1(%arg0: i32) -> (i32, i32) {
    %c0_i32 = arith.constant 0 : i32
    %c0_i32_0 = arith.constant 0 : i32
    %c0_i32_1 = arith.constant 0 : i32
    return %c0_i32, %c0_i32_0 : i32, i32
  }
  func.func @transform_2(%arg0: i32) -> (i32, i32) {
    %c0_i32 = arith.constant 0 : i32
    %c0_i32_0 = arith.constant 0 : i32
    %c0_i32_1 = arith.constant 0 : i32
    return %c0_i32, %c0_i32_0 : i32, i32
  }
  func.func @transform_3(%arg0: i32) -> (i32, i32) {
    %c0_i32 = arith.constant 0 : i32
    %c0_i32_0 = arith.constant 0 : i32
    %c0_i32_1 = arith.constant 0 : i32
    return %c0_i32, %c0_i32_0 : i32, i32
  }
  func.func @transform_4(%arg0: i32) -> (i32, i32) {
    %c0_i32 = arith.constant 0 : i32
    %c0_i32_0 = arith.constant 0 : i32
    %c0_i32_1 = arith.constant 0 : i32
    return %c0_i32, %c0_i32_0 : i32, i32
  }
  func.func @transform_5(%arg0: i32) -> (i32, i32) {
    %c0_i32 = arith.constant 0 : i32
    %c0_i32_0 = arith.constant 0 : i32
    %c0_i32_1 = arith.constant 0 : i32
    return %c0_i32, %c0_i32_0 : i32, i32
  }
  func.func @transform_6(%arg0: i32) -> (i32, i32) {
    %c0_i32 = arith.constant 0 : i32
    %c0_i32_0 = arith.constant 0 : i32
    %c0_i32_1 = arith.constant 0 : i32
    return %c0_i32, %c0_i32_0 : i32, i32
  }
  func.func @transform_7(%arg0: i32) -> (i32, i32) {
    %c0_i32 = arith.constant 0 : i32
    %c0_i32_0 = arith.constant 0 : i32
    %c0_i32_1 = arith.constant 0 : i32
    return %c0_i32, %c0_i32_0 : i32, i32
  }
  func.func @transform_8(%arg0: i32) -> (i32, i32) {
    %c0_i32 = arith.constant 0 : i32
    %c0_i32_0 = arith.constant 0 : i32
    %c0_i32_1 = arith.constant 0 : i32
    return %c0_i32, %c0_i32_0 : i32, i32
  }
  func.func @transform_9(%arg0: i32) -> (i32, i32) {
    %c0_i32 = arith.constant 0 : i32
    %c0_i32_0 = arith.constant 0 : i32
    %c0_i32_1 = arith.constant 0 : i32
    return %c0_i32, %c0_i32_0 : i32, i32
  }
  func.func @transform_10(%arg0: i32) -> (i32, i32) {
    %c0_i32 = arith.constant 0 : i32
    %c0_i32_0 = arith.constant 0 : i32
    %c0_i32_1 = arith.constant 0 : i32
    return %c0_i32, %c0_i32_0 : i32, i32
  }
  func.func @transform_11(%arg0: i32) -> (i32, i32) {
    %c0_i32 = arith.constant 0 : i32
    %c0_i32_0 = arith.constant 0 : i32
    %c0_i32_1 = arith.constant 0 : i32
    return %c0_i32, %c0_i32_0 : i32, i32
  }
  func.func @transform_12(%arg0: i32) -> (i32, i32) {
    %c0_i32 = arith.constant 0 : i32
    %c0_i32_0 = arith.constant 0 : i32
    %c0_i32_1 = arith.constant 0 : i32
    return %c0_i32, %c0_i32_0 : i32, i32
  }
  func.func @transform_13(%arg0: i32) -> (i32, i32) {
    %c0_i32 = arith.constant 0 : i32
    %c0_i32_0 = arith.constant 0 : i32
    %c0_i32_1 = arith.constant 0 : i32
    return %c0_i32, %c0_i32_0 : i32, i32
  }
  func.func @transform_14(%arg0: i32) -> (i32, i32) {
    %c0_i32 = arith.constant 0 : i32
    %c0_i32_0 = arith.constant 0 : i32
    %c0_i32_1 = arith.constant 0 : i32
    return %c0_i32, %c0_i32_0 : i32, i32
  }
}

</mosaic_0001>

<llo_original>
// kernel: att_efficient_forward.1
$region0: #{att_efficient_forward.1}
  #allocation0 [shape = 'u32[]', space=smem, size = 0x4, offset = 0x4, fixed_abs, tag = 'smem constant byte address 0x4 - core index']
  #allocation1 [shape = 'u32[72,128]{1,0:T(1,128)}', space=vmem, size = 0x9000, scoped, tag = 'internal scratch']
  #allocation2 [shape = 'f32[1,1]{1,0:T(1,128)S(1)}', space=vmem, size = 0x200, scoped, tag = 'scoped memory for att_efficient_forward.1']
  %s0 = inlined_call_operand.vmem [shape: bf16[27,2048], index: 0, kind: input, shape index: {}]
  %s1 = inlined_call_operand.vmem [shape: f32[2,8], index: 1, kind: input, shape index: {}]
  %s2 = inlined_call_operand.vmem [shape: f32[8,2], index: 2, kind: input, shape index: {}]
  %s3 = inlined_call_operand.vmem [shape: bf16[8,27], index: 3, kind: input, shape index: {}]
  %s4 = inlined_call_operand.vmem [shape: f32[8,1], index: 4, kind: input, shape index: {}]
  %s5 = inlined_call_operand.vmem [shape: f32[8,256], index: 5, kind: input, shape index: {}]
  %s6 = inlined_call_operand.vmem [shape: f32[1,256], index: 6, kind: input, shape index: {}]
  %s7 = inlined_call_operand.vmem [shape: bf16[256,256], index: 7, kind: input, shape index: {}]
  %s8 = inlined_call_operand.vmem [shape: f32[1,256], index: 8, kind: input, shape index: {}]
  %s9 = inlined_call_operand.vmem [shape: f32[1,256], index: 9, kind: input, shape index: {}]
  %s10 = inlined_call_operand.vmem [shape: bf16[256,512], index: 10, kind: input, shape index: {}]
  %s11 = inlined_call_operand.vmem [shape: f32[1,512], index: 11, kind: input, shape index: {}]
  %s12 = inlined_call_operand.vmem [shape: f32[1,512], index: 12, kind: input, shape index: {}]
  %s13 = inlined_call_operand.<no memory space> [shape: f32[1,1], index: 13, kind: input, shape index: {}]
  %s14 = inlined_call_operand.vmem [shape: f32[2,1], index: 14, kind: output, shape index: {}]
  %s15 = sld [smem:[#allocation0]]
  $region66: #{att_efficient_forward.1} parent=0
    _
  %s17 = ssub.s32 1, %s15
  %s18 = scalar_select 0, %s17, %s15
  %v19 = vstv %s13
  %20 = vst [vmem:[#allocation2] sm:$0x1] %v19
  // Predicated region
  $region2: #{att_efficient_forward.1} parent=0 // pred_check
    _
  $region3: #{att_efficient_forward.1} parent=0 // pred_check_branch
    %22 = sbr.rel (0) target = $region5
  $region4: #{att_efficient_forward.1} parent=0 // pred_region
    _
  $region5: #{att_efficient_forward.1} parent=0 // pred_fallthru
    _
  // Predicated region
  $region6: #{att_efficient_forward.1} parent=0 // pred_check
    _
  $region7: #{att_efficient_forward.1} parent=0 // pred_check_branch
    %24 = sbr.rel (0) target = $region9
  $region8: #{att_efficient_forward.1} parent=0 // pred_region
    _
  $region9: #{att_efficient_forward.1} parent=0 // pred_fallthru
    _
  // Predicated region
  $region10: #{att_efficient_forward.1} parent=0 // pred_check
    _
  $region11: #{att_efficient_forward.1} parent=0 // pred_check_branch
    %26 = sbr.rel (0) target = $region13
  $region12: #{att_efficient_forward.1} parent=0 // pred_region
    _
  $region13: #{att_efficient_forward.1} parent=0 // pred_fallthru
    _
  // Predicated region
  $region14: #{att_efficient_forward.1} parent=0 // pred_check
    _
  $region15: #{att_efficient_forward.1} parent=0 // pred_check_branch
    %28 = sbr.rel (0) target = $region17
  $region16: #{att_efficient_forward.1} parent=0 // pred_region
    _
  $region17: #{att_efficient_forward.1} parent=0 // pred_fallthru
    _
  // Predicated region
  $region18: #{att_efficient_forward.1} parent=0 // pred_check
    _
  $region19: #{att_efficient_forward.1} parent=0 // pred_check_branch
    %30 = sbr.rel (0) target = $region21
  $region20: #{att_efficient_forward.1} parent=0 // pred_region
    _
  $region21: #{att_efficient_forward.1} parent=0 // pred_fallthru
    _
  // Predicated region
  $region22: #{att_efficient_forward.1} parent=0 // pred_check
    _
  $region23: #{att_efficient_forward.1} parent=0 // pred_check_branch
    %32 = sbr.rel (0) target = $region25
  $region24: #{att_efficient_forward.1} parent=0 // pred_region
    _
  $region25: #{att_efficient_forward.1} parent=0 // pred_fallthru
    _
  // Predicated region
  $region26: #{att_efficient_forward.1} parent=0 // pred_check
    _
  $region27: #{att_efficient_forward.1} parent=0 // pred_check_branch
    %34 = sbr.rel (0) target = $region29
  $region28: #{att_efficient_forward.1} parent=0 // pred_region
    _
  $region29: #{att_efficient_forward.1} parent=0 // pred_fallthru
    _
  // Predicated region
  $region30: #{att_efficient_forward.1} parent=0 // pred_check
    _
  $region31: #{att_efficient_forward.1} parent=0 // pred_check_branch
    %36 = sbr.rel (0) target = $region33
  $region32: #{att_efficient_forward.1} parent=0 // pred_region
    _
  $region33: #{att_efficient_forward.1} parent=0 // pred_fallthru
    _
  // Predicated region
  $region34: #{att_efficient_forward.1} parent=0 // pred_check
    _
  $region35: #{att_efficient_forward.1} parent=0 // pred_check_branch
    %38 = sbr.rel (0) target = $region37
  $region36: #{att_efficient_forward.1} parent=0 // pred_region
    _
  $region37: #{att_efficient_forward.1} parent=0 // pred_fallthru
    _
  // Predicated region
  $region38: #{att_efficient_forward.1} parent=0 // pred_check
    _
  $region39: #{att_efficient_forward.1} parent=0 // pred_check_branch
    %40 = sbr.rel (0) target = $region41
  $region40: #{att_efficient_forward.1} parent=0 // pred_region
    _
  $region41: #{att_efficient_forward.1} parent=0 // pred_fallthru
    _
  // Predicated region
  $region42: #{att_efficient_forward.1} parent=0 // pred_check
    _
  $region43: #{att_efficient_forward.1} parent=0 // pred_check_branch
    %42 = sbr.rel (0) target = $region45
  $region44: #{att_efficient_forward.1} parent=0 // pred_region
    _
  $region45: #{att_efficient_forward.1} parent=0 // pred_fallthru
    _
  // Predicated region
  $region46: #{att_efficient_forward.1} parent=0 // pred_check
    _
  $region47: #{att_efficient_forward.1} parent=0 // pred_check_branch
    %44 = sbr.rel (0) target = $region49
  $region48: #{att_efficient_forward.1} parent=0 // pred_region
    _
  $region49: #{att_efficient_forward.1} parent=0 // pred_fallthru
    _
  // Predicated region
  $region50: #{att_efficient_forward.1} parent=0 // pred_check
    _
  $region51: #{att_efficient_forward.1} parent=0 // pred_check_branch
    %46 = sbr.rel (0) target = $region53
  $region52: #{att_efficient_forward.1} parent=0 // pred_region
    _
  $region53: #{att_efficient_forward.1} parent=0 // pred_fallthru
    _
  // Predicated region
  $region54: #{att_efficient_forward.1} parent=0 // pred_check
    _
  $region55: #{att_efficient_forward.1} parent=0 // pred_check_branch
    %48 = sbr.rel (0) target = $region57
  $region56: #{att_efficient_forward.1} parent=0 // pred_region
    _
  $region57: #{att_efficient_forward.1} parent=0 // pred_fallthru
    _
  %v50 = vld [vmem:[%s3] sm:$0xf]
  %v51 = vld [vmem:[%s0] sm:$0xff]
  %v52 = vld [vmem:[%s0 + $0x8] sm:$0xff]
  %v53 = vld [vmem:[%s0 + $0x10] sm:$0xff]
  %v54 = vld [vmem:[%s0 + $0x18] sm:$0xff]
  %v55 = vld [vmem:[%s0 + $0x20] sm:$0xff]
  %v56 = vld [vmem:[%s0 + $0x28] sm:$0xff]
  %v57 = vld [vmem:[%s0 + $0x30] sm:$0xff]
  %v58 = vld [vmem:[%s0 + $0x38] sm:$0xff]
  %v59 = vld [vmem:[%s0 + $0x40] sm:$0xff]
  %v60 = vld [vmem:[%s0 + $0x48] sm:$0xff]
  %v61 = vld [vmem:[%s0 + $0x50] sm:$0xff]
  %v62 = vld [vmem:[%s0 + $0x58] sm:$0xff]
  %v63 = vld [vmem:[%s0 + $0x60] sm:$0xff]
  %v64 = vld [vmem:[%s0 + $0x68] sm:$0xff]
  %v65 = vld [vmem:[%s0 + $0x70] sm:$0xff]
  %v66 = vld [vmem:[%s0 + $0x78] sm:$0xff]
  %v67 = vld [vmem:[%s0 + $0x80] sm:$0xff]
  %v68 = vld [vmem:[%s0 + $0x88] sm:$0xff]
  %v69 = vld [vmem:[%s0 + $0x90] sm:$0xff]
  %v70 = vld [vmem:[%s0 + $0x98] sm:$0xff]
  %v71 = vld [vmem:[%s0 + $0xa0] sm:$0xff]
  %v72 = vld [vmem:[%s0 + $0xa8] sm:$0xff]
  %v73 = vld [vmem:[%s0 + $0xb0] sm:$0xff]
  %v74 = vld [vmem:[%s0 + $0xb8] sm:$0xff]
  %v75 = vld [vmem:[%s0 + $0xc0] sm:$0x33]
  %v76 = vld [vmem:[%s0 + $0xc8] sm:$0x33]
  %v77 = vld [vmem:[%s0 + $0xd0] sm:$0x33]
  %v78 = vld [vmem:[%s0 + $0xd8] sm:$0x33]
  %v79 = vld [vmem:[%s0 + $0xe0] sm:$0x33]
  %v80 = vld [vmem:[%s0 + $0xe8] sm:$0x33]
  %v81 = vld [vmem:[%s0 + $0xf0] sm:$0x33]
  %v82 = vld [vmem:[%s0 + $0xf8] sm:$0x33]
  %v83 = vld [vmem:[%s4] sm:$0xff]
  %85 = vset.pattern.permute.xlu0 0
  %86 = vperm.xlu0 %85, %v83
  %v87 = vpop.permute.xlu0 %86
  %v121 = vunpack.c.l.b16 %v51
  %v122 = vunpack.c.h.b16 %v51
  %v123 = vunpack.c.l.b16 %v52
  %v124 = vunpack.c.h.b16 %v52
  %v125 = vunpack.c.l.b16 %v53
  %v126 = vunpack.c.h.b16 %v53
  %v127 = vunpack.c.l.b16 %v54
  %v128 = vunpack.c.h.b16 %v54
  %v129 = vunpack.c.l.b16 %v55
  %v130 = vunpack.c.h.b16 %v55
  %v131 = vunpack.c.l.b16 %v56
  %v132 = vunpack.c.h.b16 %v56
  %v133 = vunpack.c.l.b16 %v57
  %v134 = vunpack.c.h.b16 %v57
  %v135 = vunpack.c.l.b16 %v58
  %v136 = vunpack.c.h.b16 %v58
  %v137 = vunpack.c.l.b16 %v59
  %v138 = vunpack.c.h.b16 %v59
  %v139 = vunpack.c.l.b16 %v60
  %v140 = vunpack.c.h.b16 %v60
  %v141 = vunpack.c.l.b16 %v61
  %v142 = vunpack.c.h.b16 %v61
  %v143 = vunpack.c.l.b16 %v62
  %v144 = vunpack.c.h.b16 %v62
  %v145 = vunpack.c.l.b16 %v63
  %v146 = vunpack.c.h.b16 %v63
  %v147 = vunpack.c.l.b16 %v64
  %v148 = vunpack.c.h.b16 %v64
  %v149 = vunpack.c.l.b16 %v65
  %v150 = vunpack.c.h.b16 %v65
  %v151 = vunpack.c.l.b16 %v66
  %v152 = vunpack.c.h.b16 %v66
  %v153 = vunpack.c.l.b16 %v67
  %v154 = vunpack.c.h.b16 %v67
  %v155 = vunpack.c.l.b16 %v68
  %v156 = vunpack.c.h.b16 %v68
  %v157 = vunpack.c.l.b16 %v69
  %v158 = vunpack.c.h.b16 %v69
  %v159 = vunpack.c.l.b16 %v70
  %v160 = vunpack.c.h.b16 %v70
  %v161 = vunpack.c.l.b16 %v71
  %v162 = vunpack.c.h.b16 %v71
  %v163 = vunpack.c.l.b16 %v72
  %v164 = vunpack.c.h.b16 %v72
  %v165 = vunpack.c.l.b16 %v73
  %v166 = vunpack.c.h.b16 %v73
  %v167 = vunpack.c.l.b16 %v74
  %v168 = vunpack.c.h.b16 %v74
  %v169 = vunpack.c.l.b16 %v75
  %v170 = vunpack.c.h.b16 %v75
  %v171 = vunpack.c.l.b16 %v76
  %v172 = vunpack.c.h.b16 %v76
  %v173 = vunpack.c.l.b16 %v77
  %v174 = vunpack.c.h.b16 %v77
  %v175 = vunpack.c.l.b16 %v78
  %v176 = vunpack.c.h.b16 %v78
  %v177 = vunpack.c.l.b16 %v79
  %v178 = vunpack.c.h.b16 %v79
  %v179 = vunpack.c.l.b16 %v80
  %v180 = vunpack.c.h.b16 %v80
  %v181 = vunpack.c.l.b16 %v81
  %v182 = vunpack.c.h.b16 %v81
  %v183 = vunpack.c.l.b16 %v82
  %v184 = vunpack.c.h.b16 %v82
  %v185 = vpack.c.b16 %v137, %v121
  %v186 = vpack.c.b16 %v138, %v122
  %v187 = vpack.c.b16 %v139, %v123
  %v188 = vpack.c.b16 %v140, %v124
  %v189 = vpack.c.b16 %v141, %v125
  %v190 = vpack.c.b16 %v142, %v126
  %v191 = vpack.c.b16 %v143, %v127
  %v192 = vpack.c.b16 %v144, %v128
  %v193 = vpack.c.b16 %v145, %v129
  %v194 = vpack.c.b16 %v146, %v130
  %v195 = vpack.c.b16 %v147, %v131
  %v196 = vpack.c.b16 %v148, %v132
  %v197 = vpack.c.b16 %v149, %v133
  %v198 = vpack.c.b16 %v150, %v134
  %v199 = vpack.c.b16 %v151, %v135
  %v200 = vpack.c.b16 %v152, %v136
  %v201 = vpack.c.b16 %v169, %v153
  %v202 = vpack.c.b16 %v170, %v154
  %v203 = vpack.c.b16 %v171, %v155
  %v204 = vpack.c.b16 %v172, %v156
  %v205 = vpack.c.b16 %v173, %v157
  %v206 = vpack.c.b16 %v174, %v158
  %v207 = vpack.c.b16 %v175, %v159
  %v208 = vpack.c.b16 %v176, %v160
  %v209 = vpack.c.b16 %v177, %v161
  %v210 = vpack.c.b16 %v178, %v162
  %v211 = vpack.c.b16 %v179, %v163
  %v212 = vpack.c.b16 %v180, %v164
  %v213 = vpack.c.b16 %v181, %v165
  %v214 = vpack.c.b16 %v182, %v166
  %v215 = vpack.c.b16 %v183, %v167
  %v216 = vpack.c.b16 %v184, %v168
  %vm233 = vcmask 220160
  %v235 = vsel %vm233, %v50, 0
  %vm237 = vcmask 1044480
  %vm238 = vcmask 1045504
  %v239 = vsel %vm237, 4294967295, 65535
  %v240 = vsel %vm238, %v239, 0
  %v242 = vand.u32 %v201, %v240
  %v245 = vand.u32 %v202, %v240
  %v248 = vand.u32 %v203, %v240
  %v251 = vand.u32 %v204, %v240
  %v254 = vand.u32 %v205, %v240
  %v257 = vand.u32 %v206, %v240
  %v260 = vand.u32 %v207, %v240
  %v263 = vand.u32 %v208, %v240
  %v266 = vand.u32 %v209, %v240
  %v269 = vand.u32 %v210, %v240
  %v272 = vand.u32 %v211, %v240
  %v275 = vand.u32 %v212, %v240
  %v278 = vand.u32 %v213, %v240
  %v281 = vand.u32 %v214, %v240
  %v284 = vand.u32 %v215, %v240
  %v287 = vand.u32 %v216, %v240
  %289 = vmatpush.bf16.msra.mxu0 0
  %290 = vmatpush.bf16.msra.mxu0 0
  %291 = vmatpush.bf16.msra.mxu0 0
  %292 = vmatpush.bf16.msra.mxu0 0
  %293 = vmatpush.bf16.msra.mxu0 0
  %294 = vmatpush.bf16.msra.mxu0 0
  %295 = vmatpush.bf16.msra.mxu0 %v242
  %296 = vmatpush.bf16.msra.mxu0 %v185
  %297 = vmatmul.bf16.gmra.mxu0 %v235
  %v298 = vpop.f32.mrf.mxu0
  %v299 = vadd.f32 %v87, %v298
  %v300 = vpop.f32.mrf.mxu0
  %301 = vdwg.mxu0
  %302 = vmatpush.bf16.msra.mxu0 0
  %303 = vmatpush.bf16.msra.mxu0 0
  %304 = vmatpush.bf16.msra.mxu0 0
  %305 = vmatpush.bf16.msra.mxu0 0
  %306 = vmatpush.bf16.msra.mxu0 0
  %307 = vmatpush.bf16.msra.mxu0 0
  %308 = vmatpush.bf16.msra.mxu0 %v245
  %309 = vmatpush.bf16.msra.mxu0 %v186
  %310 = vmatmul.bf16.gmra.mxu0 %v235
  %v311 = vpop.f32.mrf.mxu0
  %v312 = vadd.f32 %v87, %v311
  %v313 = vpop.f32.mrf.mxu0
  %314 = vdwg.mxu0
  %315 = vmatpush.bf16.msra.mxu0 0
  %316 = vmatpush.bf16.msra.mxu0 0
  %317 = vmatpush.bf16.msra.mxu0 0
  %318 = vmatpush.bf16.msra.mxu0 0
  %319 = vmatpush.bf16.msra.mxu0 0
  %320 = vmatpush.bf16.msra.mxu0 0
  %321 = vmatpush.bf16.msra.mxu0 %v248
  %322 = vmatpush.bf16.msra.mxu0 %v187
  %323 = vmatmul.bf16.gmra.mxu0 %v235
  %v324 = vpop.f32.mrf.mxu0
  %v325 = vadd.f32 %v87, %v324
  %v326 = vpop.f32.mrf.mxu0
  %327 = vdwg.mxu0
  %328 = vmatpush.bf16.msra.mxu0 0
  %329 = vmatpush.bf16.msra.mxu0 0
  %330 = vmatpush.bf16.msra.mxu0 0
  %331 = vmatpush.bf16.msra.mxu0 0
  %332 = vmatpush.bf16.msra.mxu0 0
  %333 = vmatpush.bf16.msra.mxu0 0
  %334 = vmatpush.bf16.msra.mxu0 %v251
  %335 = vmatpush.bf16.msra.mxu0 %v188
  %336 = vmatmul.bf16.gmra.mxu0 %v235
  %v337 = vpop.f32.mrf.mxu0
  %v338 = vadd.f32 %v87, %v337
  %v339 = vpop.f32.mrf.mxu0
  %340 = vdwg.mxu0
  %341 = vmatpush.bf16.msra.mxu0 0
  %342 = vmatpush.bf16.msra.mxu0 0
  %343 = vmatpush.bf16.msra.mxu0 0
  %344 = vmatpush.bf16.msra.mxu0 0
  %345 = vmatpush.bf16.msra.mxu0 0
  %346 = vmatpush.bf16.msra.mxu0 0
  %347 = vmatpush.bf16.msra.mxu0 %v254
  %348 = vmatpush.bf16.msra.mxu0 %v189
  %349 = vmatmul.bf16.gmra.mxu0 %v235
  %v350 = vpop.f32.mrf.mxu0
  %v351 = vadd.f32 %v87, %v350
  %v352 = vpop.f32.mrf.mxu0
  %353 = vdwg.mxu0
  %354 = vmatpush.bf16.msra.mxu0 0
  %355 = vmatpush.bf16.msra.mxu0 0
  %356 = vmatpush.bf16.msra.mxu0 0
  %357 = vmatpush.bf16.msra.mxu0 0
  %358 = vmatpush.bf16.msra.mxu0 0
  %359 = vmatpush.bf16.msra.mxu0 0
  %360 = vmatpush.bf16.msra.mxu0 %v257
  %361 = vmatpush.bf16.msra.mxu0 %v190
  %362 = vmatmul.bf16.gmra.mxu0 %v235
  %v363 = vpop.f32.mrf.mxu0
  %v364 = vadd.f32 %v87, %v363
  %v365 = vpop.f32.mrf.mxu0
  %366 = vdwg.mxu0
  %367 = vmatpush.bf16.msra.mxu0 0
  %368 = vmatpush.bf16.msra.mxu0 0
  %369 = vmatpush.bf16.msra.mxu0 0
  %370 = vmatpush.bf16.msra.mxu0 0
  %371 = vmatpush.bf16.msra.mxu0 0
  %372 = vmatpush.bf16.msra.mxu0 0
  %373 = vmatpush.bf16.msra.mxu0 %v260
  %374 = vmatpush.bf16.msra.mxu0 %v191
  %375 = vmatmul.bf16.gmra.mxu0 %v235
  %v376 = vpop.f32.mrf.mxu0
  %v377 = vadd.f32 %v87, %v376
  %v378 = vpop.f32.mrf.mxu0
  %379 = vdwg.mxu0
  %380 = vmatpush.bf16.msra.mxu0 0
  %381 = vmatpush.bf16.msra.mxu0 0
  %382 = vmatpush.bf16.msra.mxu0 0
  %383 = vmatpush.bf16.msra.mxu0 0
  %384 = vmatpush.bf16.msra.mxu0 0
  %385 = vmatpush.bf16.msra.mxu0 0
  %386 = vmatpush.bf16.msra.mxu0 %v263
  %387 = vmatpush.bf16.msra.mxu0 %v192
  %388 = vmatmul.bf16.gmra.mxu0 %v235
  %v389 = vpop.f32.mrf.mxu0
  %v390 = vadd.f32 %v87, %v389
  %v391 = vpop.f32.mrf.mxu0
  %392 = vdwg.mxu0
  %393 = vmatpush.bf16.msra.mxu0 0
  %394 = vmatpush.bf16.msra.mxu0 0
  %395 = vmatpush.bf16.msra.mxu0 0
  %396 = vmatpush.bf16.msra.mxu0 0
  %397 = vmatpush.bf16.msra.mxu0 0
  %398 = vmatpush.bf16.msra.mxu0 0
  %399 = vmatpush.bf16.msra.mxu0 %v266
  %400 = vmatpush.bf16.msra.mxu0 %v193
  %401 = vmatmul.bf16.gmra.mxu0 %v235
  %v402 = vpop.f32.mrf.mxu0
  %v403 = vadd.f32 %v87, %v402
  %v404 = vpop.f32.mrf.mxu0
  %405 = vdwg.mxu0
  %406 = vmatpush.bf16.msra.mxu0 0
  %407 = vmatpush.bf16.msra.mxu0 0
  %408 = vmatpush.bf16.msra.mxu0 0
  %409 = vmatpush.bf16.msra.mxu0 0
  %410 = vmatpush.bf16.msra.mxu0 0
  %411 = vmatpush.bf16.msra.mxu0 0
  %412 = vmatpush.bf16.msra.mxu0 %v269
  %413 = vmatpush.bf16.msra.mxu0 %v194
  %414 = vmatmul.bf16.gmra.mxu0 %v235
  %v415 = vpop.f32.mrf.mxu0
  %v416 = vadd.f32 %v87, %v415
  %v417 = vpop.f32.mrf.mxu0
  %418 = vdwg.mxu0
  %419 = vmatpush.bf16.msra.mxu0 0
  %420 = vmatpush.bf16.msra.mxu0 0
  %421 = vmatpush.bf16.msra.mxu0 0
  %422 = vmatpush.bf16.msra.mxu0 0
  %423 = vmatpush.bf16.msra.mxu0 0
  %424 = vmatpush.bf16.msra.mxu0 0
  %425 = vmatpush.bf16.msra.mxu0 %v272
  %426 = vmatpush.bf16.msra.mxu0 %v195
  %427 = vmatmul.bf16.gmra.mxu0 %v235
  %v428 = vpop.f32.mrf.mxu0
  %v429 = vadd.f32 %v87, %v428
  %v430 = vpop.f32.mrf.mxu0
  %431 = vdwg.mxu0
  %432 = vmatpush.bf16.msra.mxu0 0
  %433 = vmatpush.bf16.msra.mxu0 0
  %434 = vmatpush.bf16.msra.mxu0 0
  %435 = vmatpush.bf16.msra.mxu0 0
  %436 = vmatpush.bf16.msra.mxu0 0
  %437 = vmatpush.bf16.msra.mxu0 0
  %438 = vmatpush.bf16.msra.mxu0 %v275
  %439 = vmatpush.bf16.msra.mxu0 %v196
  %440 = vmatmul.bf16.gmra.mxu0 %v235
  %v441 = vpop.f32.mrf.mxu0
  %v442 = vadd.f32 %v87, %v441
  %v443 = vpop.f32.mrf.mxu0
  %444 = vdwg.mxu0
  %445 = vmatpush.bf16.msra.mxu0 0
  %446 = vmatpush.bf16.msra.mxu0 0
  %447 = vmatpush.bf16.msra.mxu0 0
  %448 = vmatpush.bf16.msra.mxu0 0
  %449 = vmatpush.bf16.msra.mxu0 0
  %450 = vmatpush.bf16.msra.mxu0 0
  %451 = vmatpush.bf16.msra.mxu0 %v278
  %452 = vmatpush.bf16.msra.mxu0 %v197
  %453 = vmatmul.bf16.gmra.mxu0 %v235
  %v454 = vpop.f32.mrf.mxu0
  %v455 = vadd.f32 %v87, %v454
  %v456 = vpop.f32.mrf.mxu0
  %457 = vdwg.mxu0
  %458 = vmatpush.bf16.msra.mxu0 0
  %459 = vmatpush.bf16.msra.mxu0 0
  %460 = vmatpush.bf16.msra.mxu0 0
  %461 = vmatpush.bf16.msra.mxu0 0
  %462 = vmatpush.bf16.msra.mxu0 0
  %463 = vmatpush.bf16.msra.mxu0 0
  %464 = vmatpush.bf16.msra.mxu0 %v281
  %465 = vmatpush.bf16.msra.mxu0 %v198
  %466 = vmatmul.bf16.gmra.mxu0 %v235
  %v467 = vpop.f32.mrf.mxu0
  %v468 = vadd.f32 %v87, %v467
  %v469 = vpop.f32.mrf.mxu0
  %470 = vdwg.mxu0
  %471 = vmatpush.bf16.msra.mxu0 0
  %472 = vmatpush.bf16.msra.mxu0 0
  %473 = vmatpush.bf16.msra.mxu0 0
  %474 = vmatpush.bf16.msra.mxu0 0
  %475 = vmatpush.bf16.msra.mxu0 0
  %476 = vmatpush.bf16.msra.mxu0 0
  %477 = vmatpush.bf16.msra.mxu0 %v284
  %478 = vmatpush.bf16.msra.mxu0 %v199
  %479 = vmatmul.bf16.gmra.mxu0 %v235
  %v480 = vpop.f32.mrf.mxu0
  %v481 = vadd.f32 %v87, %v480
  %v482 = vpop.f32.mrf.mxu0
  %483 = vdwg.mxu0
  %484 = vmatpush.bf16.msra.mxu0 0
  %485 = vmatpush.bf16.msra.mxu0 0
  %486 = vmatpush.bf16.msra.mxu0 0
  %487 = vmatpush.bf16.msra.mxu0 0
  %488 = vmatpush.bf16.msra.mxu0 0
  %489 = vmatpush.bf16.msra.mxu0 0
  %490 = vmatpush.bf16.msra.mxu0 %v287
  %491 = vmatpush.bf16.msra.mxu0 %v200
  %492 = vmatmul.bf16.gmra.mxu0 %v235
  %v493 = vpop.f32.mrf.mxu0
  %v494 = vadd.f32 %v87, %v493
  %v495 = vpop.f32.mrf.mxu0
  %496 = vdwg.mxu0
  %v497 = vmax.f32 %v299, 0.0
  %v498 = vmax.f32 %v312, 0.0
  %v499 = vmax.f32 %v325, 0.0
  %v500 = vmax.f32 %v338, 0.0
  %v501 = vmax.f32 %v351, 0.0
  %v502 = vmax.f32 %v364, 0.0
  %v503 = vmax.f32 %v377, 0.0
  %v504 = vmax.f32 %v390, 0.0
  %v505 = vmax.f32 %v403, 0.0
  %v506 = vmax.f32 %v416, 0.0
  %v507 = vmax.f32 %v429, 0.0
  %v508 = vmax.f32 %v442, 0.0
  %v509 = vmax.f32 %v455, 0.0
  %v510 = vmax.f32 %v468, 0.0
  %v511 = vmax.f32 %v481, 0.0
  %v512 = vmax.f32 %v494, 0.0
  %v513 = vrot.slane %v501, 4
  %vm514 = vcmask 1047556
  %v515 = vsel %vm514, %v513, %v497
  %v516 = vrot.slane %v497, 4
  %v517 = vsel %vm514, %v501, %v516
  %v519 = vunpack.c.l.s4 1983009808
  %v520 = vunpack.c.0.s8 %v519
  %v521 = vperm.slane %v515, %v520
  %v523 = vunpack.c.l.s4 1983009808
  %v524 = vunpack.c.0.s8 %v523
  %v525 = vperm.slane %v517, %v524
  %v526 = vrot.slane %v503, 4
  %v527 = vsel %vm514, %v526, %v499
  %v528 = vrot.slane %v499, 4
  %v529 = vsel %vm514, %v503, %v528
  %v531 = vunpack.c.l.s4 1983009808
  %v532 = vunpack.c.0.s8 %v531
  %v533 = vperm.slane %v527, %v532
  %v535 = vunpack.c.l.s4 1983009808
  %v536 = vunpack.c.0.s8 %v535
  %v537 = vperm.slane %v529, %v536
  %v538 = vrot.slane %v509, 4
  %v539 = vsel %vm514, %v538, %v505
  %v540 = vrot.slane %v505, 4
  %v541 = vsel %vm514, %v509, %v540
  %v543 = vunpack.c.l.s4 1983009808
  %v544 = vunpack.c.0.s8 %v543
  %v545 = vperm.slane %v539, %v544
  %v547 = vunpack.c.l.s4 1983009808
  %v548 = vunpack.c.0.s8 %v547
  %v549 = vperm.slane %v541, %v548
  %v550 = vrot.slane %v511, 4
  %v551 = vsel %vm514, %v550, %v507
  %v552 = vrot.slane %v507, 4
  %v553 = vsel %vm514, %v511, %v552
  %v555 = vunpack.c.l.s4 1983009808
  %v556 = vunpack.c.0.s8 %v555
  %v557 = vperm.slane %v551, %v556
  %v559 = vunpack.c.l.s4 1983009808
  %v560 = vunpack.c.0.s8 %v559
  %v561 = vperm.slane %v553, %v560
  %v562 = vrot.slane %v533, 4
  %v563 = vsel %vm514, %v562, %v521
  %v564 = vrot.slane %v521, 4
  %v565 = vsel %vm514, %v533, %v564
  %v567 = vunpack.c.l.s4 1934713408
  %v568 = vunpack.c.0.s8 %v567
  %v569 = vperm.slane %v563, %v568
  %v571 = vunpack.c.l.s4 1934713408
  %v572 = vunpack.c.0.s8 %v571
  %v573 = vperm.slane %v565, %v572
  %v574 = vrot.slane %v537, 4
  %v575 = vsel %vm514, %v574, %v525
  %v576 = vrot.slane %v525, 4
  %v577 = vsel %vm514, %v537, %v576
  %v579 = vunpack.c.l.s4 1934713408
  %v580 = vunpack.c.0.s8 %v579
  %v581 = vperm.slane %v575, %v580
  %v583 = vunpack.c.l.s4 1934713408
  %v584 = vunpack.c.0.s8 %v583
  %v585 = vperm.slane %v577, %v584
  %v586 = vrot.slane %v557, 4
  %v587 = vsel %vm514, %v586, %v545
  %v588 = vrot.slane %v545, 4
  %v589 = vsel %vm514, %v557, %v588
  %v591 = vunpack.c.l.s4 1934713408
  %v592 = vunpack.c.0.s8 %v591
  %v593 = vperm.slane %v587, %v592
  %v595 = vunpack.c.l.s4 1934713408
  %v596 = vunpack.c.0.s8 %v595
  %v597 = vperm.slane %v589, %v596
  %v598 = vrot.slane %v561, 4
  %v599 = vsel %vm514, %v598, %v549
  %v600 = vrot.slane %v549, 4
  %v601 = vsel %vm514, %v561, %v600
  %v603 = vunpack.c.l.s4 1934713408
  %v604 = vunpack.c.0.s8 %v603
  %v605 = vperm.slane %v599, %v604
  %v607 = vunpack.c.l.s4 1934713408
  %v608 = vunpack.c.0.s8 %v607
  %v609 = vperm.slane %v601, %v608
  %v610 = vrot.slane %v593, 4
  %v611 = vsel %vm514, %v610, %v569
  %v612 = vrot.slane %v569, 4
  %v613 = vsel %vm514, %v593, %v612
  %v614 = vrot.slane %v597, 4
  %v615 = vsel %vm514, %v614, %v573
  %v616 = vrot.slane %v573, 4
  %v617 = vsel %vm514, %v597, %v616
  %v618 = vrot.slane %v605, 4
  %v619 = vsel %vm514, %v618, %v581
  %v620 = vrot.slane %v581, 4
  %v621 = vsel %vm514, %v605, %v620
  %v622 = vrot.slane %v609, 4
  %v623 = vsel %vm514, %v622, %v585
  %v624 = vrot.slane %v585, 4
  %v625 = vsel %vm514, %v609, %v624
  %v626 = vrot.slane %v502, 4
  %v627 = vsel %vm514, %v626, %v498
  %v628 = vrot.slane %v498, 4
  %v629 = vsel %vm514, %v502, %v628
  %v631 = vunpack.c.l.s4 1983009808
  %v632 = vunpack.c.0.s8 %v631
  %v633 = vperm.slane %v627, %v632
  %v635 = vunpack.c.l.s4 1983009808
  %v636 = vunpack.c.0.s8 %v635
  %v637 = vperm.slane %v629, %v636
  %v638 = vrot.slane %v504, 4
  %v639 = vsel %vm514, %v638, %v500
  %v640 = vrot.slane %v500, 4
  %v641 = vsel %vm514, %v504, %v640
  %v643 = vunpack.c.l.s4 1983009808
  %v644 = vunpack.c.0.s8 %v643
  %v645 = vperm.slane %v639, %v644
  %v647 = vunpack.c.l.s4 1983009808
  %v648 = vunpack.c.0.s8 %v647
  %v649 = vperm.slane %v641, %v648
  %v650 = vrot.slane %v510, 4
  %v651 = vsel %vm514, %v650, %v506
  %v652 = vrot.slane %v506, 4
  %v653 = vsel %vm514, %v510, %v652
  %v655 = vunpack.c.l.s4 1983009808
  %v656 = vunpack.c.0.s8 %v655
  %v657 = vperm.slane %v651, %v656
  %v659 = vunpack.c.l.s4 1983009808
  %v660 = vunpack.c.0.s8 %v659
  %v661 = vperm.slane %v653, %v660
  %v662 = vrot.slane %v512, 4
  %v663 = vsel %vm514, %v662, %v508
  %v664 = vrot.slane %v508, 4
  %v665 = vsel %vm514, %v512, %v664
  %v667 = vunpack.c.l.s4 1983009808
  %v668 = vunpack.c.0.s8 %v667
  %v669 = vperm.slane %v663, %v668
  %v671 = vunpack.c.l.s4 1983009808
  %v672 = vunpack.c.0.s8 %v671
  %v673 = vperm.slane %v665, %v672
  %v674 = vrot.slane %v645, 4
  %v675 = vsel %vm514, %v674, %v633
  %v676 = vrot.slane %v633, 4
  %v677 = vsel %vm514, %v645, %v676
  %v679 = vunpack.c.l.s4 1934713408
  %v680 = vunpack.c.0.s8 %v679
  %v681 = vperm.slane %v675, %v680
  %v683 = vunpack.c.l.s4 1934713408
  %v684 = vunpack.c.0.s8 %v683
  %v685 = vperm.slane %v677, %v684
  %v686 = vrot.slane %v649, 4
  %v687 = vsel %vm514, %v686, %v637
  %v688 = vrot.slane %v637, 4
  %v689 = vsel %vm514, %v649, %v688
  %v691 = vunpack.c.l.s4 1934713408
  %v692 = vunpack.c.0.s8 %v691
  %v693 = vperm.slane %v687, %v692
  %v695 = vunpack.c.l.s4 1934713408
  %v696 = vunpack.c.0.s8 %v695
  %v697 = vperm.slane %v689, %v696
  %v698 = vrot.slane %v669, 4
  %v699 = vsel %vm514, %v698, %v657
  %v700 = vrot.slane %v657, 4
  %v701 = vsel %vm514, %v669, %v700
  %v703 = vunpack.c.l.s4 1934713408
  %v704 = vunpack.c.0.s8 %v703
  %v705 = vperm.slane %v699, %v704
  %v707 = vunpack.c.l.s4 1934713408
  %v708 = vunpack.c.0.s8 %v707
  %v709 = vperm.slane %v701, %v708
  %v710 = vrot.slane %v673, 4
  %v711 = vsel %vm514, %v710, %v661
  %v712 = vrot.slane %v661, 4
  %v713 = vsel %vm514, %v673, %v712
  %v715 = vunpack.c.l.s4 1934713408
  %v716 = vunpack.c.0.s8 %v715
  %v717 = vperm.slane %v711, %v716
  %v719 = vunpack.c.l.s4 1934713408
  %v720 = vunpack.c.0.s8 %v719
  %v721 = vperm.slane %v713, %v720
  %v722 = vrot.slane %v705, 4
  %v723 = vsel %vm514, %v722, %v681
  %v724 = vrot.slane %v681, 4
  %v725 = vsel %vm514, %v705, %v724
  %v726 = vrot.slane %v709, 4
  %v727 = vsel %vm514, %v726, %v685
  %v728 = vrot.slane %v685, 4
  %v729 = vsel %vm514, %v709, %v728
  %v730 = vrot.slane %v717, 4
  %v731 = vsel %vm514, %v730, %v693
  %v732 = vrot.slane %v693, 4
  %v733 = vsel %vm514, %v717, %v732
  %v734 = vrot.slane %v721, 4
  %v735 = vsel %vm514, %v734, %v697
  %v736 = vrot.slane %v697, 4
  %v737 = vsel %vm514, %v721, %v736
  %v738 = vadd.f32 %v611, %v723
  %739 = vadd.xlane.f32.xlu0 %v738
  %v740 = vpop.xlane.xlu0 %739
  %v741 = vadd.f32 %v613, %v725
  %742 = vadd.xlane.f32.xlu0 %v741
  %v743 = vpop.xlane.xlu0 %742
  %v744 = vadd.f32 %v615, %v727
  %745 = vadd.xlane.f32.xlu0 %v744
  %v746 = vpop.xlane.xlu0 %745
  %v747 = vadd.f32 %v617, %v729
  %748 = vadd.xlane.f32.xlu0 %v747
  %v749 = vpop.xlane.xlu0 %748
  %v750 = vadd.f32 %v619, %v731
  %751 = vadd.xlane.f32.xlu0 %v750
  %v752 = vpop.xlane.xlu0 %751
  %v753 = vadd.f32 %v621, %v733
  %754 = vadd.xlane.f32.xlu0 %v753
  %v755 = vpop.xlane.xlu0 %754
  %v756 = vadd.f32 %v623, %v735
  %757 = vadd.xlane.f32.xlu0 %v756
  %v758 = vpop.xlane.xlu0 %757
  %v759 = vadd.f32 %v625, %v737
  %760 = vadd.xlane.f32.xlu0 %v759
  %v761 = vpop.xlane.xlu0 %760
  %v762 = vrcp.pop 256.0
  %v763 = vmul.f32 256.0, %v762
  %v764 = vsub.f32 1.0, %v763
  %v765 = vmul.f32 %v762, %v764
  %v766 = vadd.f32 %v762, %v765
  %vm767 = vweird.f32 %v762
  %v768 = vsel %vm767, %v762, %v766
  %v769 = vmul.f32 %v740, %v768
  %v770 = vmul.f32 %v743, %v768
  %v771 = vmul.f32 %v746, %v768
  %v772 = vmul.f32 %v749, %v768
  %v773 = vmul.f32 %v752, %v768
  %v774 = vmul.f32 %v755, %v768
  %v775 = vmul.f32 %v758, %v768
  %v776 = vmul.f32 %v761, %v768
  %v777 = vld [vmem:[%s5] sm:$0xff]
  %v778 = vld [vmem:[%s5 + $0x8] sm:$0xff]
  %v779 = vld [vmem:[%s6] sm:$0x3]
  %v781 = vperm.slane %v779, 0
  %v782 = vperm.slane %v779, 1
  %v793 = vlaneseq
  %v794 = vand.u32 %v793, 127
  %v795 = vperm.slane %v769, %v794
  %v796 = vperm.slane %v770, %v794
  %v797 = vperm.slane %v771, %v794
  %v798 = vperm.slane %v772, %v794
  %v799 = vperm.slane %v773, %v794
  %v800 = vperm.slane %v774, %v794
  %v801 = vperm.slane %v775, %v794
  %v802 = vperm.slane %v776, %v794
  %vm803 = vcmask 1041409
  %v804 = vsel %vm803, %v796, %v795
  %vm805 = vcmask 1042434
  %v806 = vsel %vm805, %v797, %v804
  %vm807 = vcmask 1043459
  %v808 = vsel %vm807, %v798, %v806
  %vm809 = vcmask 1044484
  %v810 = vsel %vm809, %v799, %v808
  %vm811 = vcmask 1045509
  %v812 = vsel %vm811, %v800, %v810
  %vm813 = vcmask 1046534
  %v814 = vsel %vm813, %v801, %v812
  %vm815 = vcmask 1047559
  %v816 = vsel %vm815, %v802, %v814
  %818 = vxpose.xlu0.b32.start [1/16] %v816, 128
  %819 = vxpose.xlu0.b32.cont [2/16] 0.0, 128
  %820 = vxpose.xlu0.b32.cont [3/16] 0.0, 128
  %821 = vxpose.xlu0.b32.cont [4/16] 0.0, 128
  %822 = vxpose.xlu0.b32.cont [5/16] 0.0, 128
  %823 = vxpose.xlu0.b32.cont [6/16] 0.0, 128
  %824 = vxpose.xlu0.b32.cont [7/16] 0.0, 128
  %825 = vxpose.xlu0.b32.cont [8/16] 0.0, 128
  %826 = vxpose.xlu0.b32.cont [9/16] 0.0, 128
  %827 = vxpose.xlu0.b32.cont [10/16] 0.0, 128
  %828 = vxpose.xlu0.b32.cont [11/16] 0.0, 128
  %829 = vxpose.xlu0.b32.cont [12/16] 0.0, 128
  %830 = vxpose.xlu0.b32.cont [13/16] 0.0, 128
  %831 = vxpose.xlu0.b32.cont [14/16] 0.0, 128
  %832 = vxpose.xlu0.b32.cont [15/16] 0.0, 128
  %833 = vxpose.xlu0.b32.end [16/16] 0.0, 128
  %v834 = vpop.trf.xlu0
  %v835 = vpop.trf.xlu0
  %v836 = vpop.trf.xlu0
  %v837 = vpop.trf.xlu0
  %v838 = vpop.trf.xlu0
  %v839 = vpop.trf.xlu0
  %v840 = vpop.trf.xlu0
  %v841 = vpop.trf.xlu0
  %v842 = vpop.trf.xlu0
  %v843 = vpop.trf.xlu0
  %v844 = vpop.trf.xlu0
  %v845 = vpop.trf.xlu0
  %v846 = vpop.trf.xlu0
  %v847 = vpop.trf.xlu0
  %v848 = vpop.trf.xlu0
  %v849 = vpop.trf.xlu0
  %vm850 = vcmask 64512
  %v852 = vsel %vm850, %v834, 0
  %854 = vmatpush.msra.mxu0 0.0
  %855 = vmatpush.msra.mxu0 0.0
  %856 = vmatpush.msra.mxu0 0.0
  %857 = vmatpush.msra.mxu0 0.0
  %858 = vmatpush.msra.mxu0 0.0
  %859 = vmatpush.msra.mxu0 0.0
  %860 = vmatpush.msra.mxu0 0.0
  %861 = vmatpush.msra.mxu0 0.0
  %862 = vmatpush.msra.mxu0 0.0
  %863 = vmatpush.msra.mxu0 0.0
  %864 = vmatpush.msra.mxu0 0.0
  %865 = vmatpush.msra.mxu0 0.0
  %866 = vmatpush.msra.mxu0 0.0
  %867 = vmatpush.msra.mxu0 0.0
  %868 = vmatpush.msra.mxu0 0.0
  %869 = vmatpush.msra.mxu0 %v777
  %870 = vmatmul.f32.gmra.mxu0 %v852
  %v871 = vpop.f32.mrf.mxu0
  %v872 = vadd.f32 %v781, %v871
  %873 = vdwg.mxu0
  %874 = vmatpush.msra.mxu0 0.0
  %875 = vmatpush.msra.mxu0 0.0
  %876 = vmatpush.msra.mxu0 0.0
  %877 = vmatpush.msra.mxu0 0.0
  %878 = vmatpush.msra.mxu0 0.0
  %879 = vmatpush.msra.mxu0 0.0
  %880 = vmatpush.msra.mxu0 0.0
  %881 = vmatpush.msra.mxu0 0.0
  %882 = vmatpush.msra.mxu0 0.0
  %883 = vmatpush.msra.mxu0 0.0
  %884 = vmatpush.msra.mxu0 0.0
  %885 = vmatpush.msra.mxu0 0.0
  %886 = vmatpush.msra.mxu0 0.0
  %887 = vmatpush.msra.mxu0 0.0
  %888 = vmatpush.msra.mxu0 0.0
  %889 = vmatpush.msra.mxu0 %v778
  %890 = vmatmul.f32.gmra.mxu0 %v852
  %v891 = vpop.f32.mrf.mxu0
  %v892 = vadd.f32 %v782, %v891
  %893 = vdwg.mxu0
  %v894 = vpack.c.bf16 %v872, %v872
  %v895 = vpack.c.bf16 %v892, %v892
  %v896 = vld [vmem:[%s7] sm:$0xff]
  %v897 = vld [vmem:[%s7 + $0x8] sm:$0xff]
  %v898 = vld [vmem:[%s7 + $0x10] sm:$0xff]
  %v899 = vld [vmem:[%s7 + $0x18] sm:$0xff]
  %v900 = vld [vmem:[%s7 + $0x20] sm:$0xff]
  %v901 = vld [vmem:[%s7 + $0x28] sm:$0xff]
  %v902 = vld [vmem:[%s7 + $0x30] sm:$0xff]
  %v903 = vld [vmem:[%s7 + $0x38] sm:$0xff]
  %v904 = vld [vmem:[%s7 + $0x40] sm:$0xff]
  %v905 = vld [vmem:[%s7 + $0x48] sm:$0xff]
  %v906 = vld [vmem:[%s7 + $0x50] sm:$0xff]
  %v907 = vld [vmem:[%s7 + $0x58] sm:$0xff]
  %v908 = vld [vmem:[%s7 + $0x60] sm:$0xff]
  %v909 = vld [vmem:[%s7 + $0x68] sm:$0xff]
  %v910 = vld [vmem:[%s7 + $0x70] sm:$0xff]
  %v911 = vld [vmem:[%s7 + $0x78] sm:$0xff]
  %v912 = vld [vmem:[%s7 + $0x80] sm:$0xff]
  %v913 = vld [vmem:[%s7 + $0x88] sm:$0xff]
  %v914 = vld [vmem:[%s7 + $0x90] sm:$0xff]
  %v915 = vld [vmem:[%s7 + $0x98] sm:$0xff]
  %v916 = vld [vmem:[%s7 + $0xa0] sm:$0xff]
  %v917 = vld [vmem:[%s7 + $0xa8] sm:$0xff]
  %v918 = vld [vmem:[%s7 + $0xb0] sm:$0xff]
  %v919 = vld [vmem:[%s7 + $0xb8] sm:$0xff]
  %v920 = vld [vmem:[%s7 + $0xc0] sm:$0xff]
  %v921 = vld [vmem:[%s7 + $0xc8] sm:$0xff]
  %v922 = vld [vmem:[%s7 + $0xd0] sm:$0xff]
  %v923 = vld [vmem:[%s7 + $0xd8] sm:$0xff]
  %v924 = vld [vmem:[%s7 + $0xe0] sm:$0xff]
  %v925 = vld [vmem:[%s7 + $0xe8] sm:$0xff]
  %v926 = vld [vmem:[%s7 + $0xf0] sm:$0xff]
  %v927 = vld [vmem:[%s7 + $0xf8] sm:$0xff]
  %v928 = vld [vmem:[%s8] sm:$0x3]
  %v930 = vperm.slane %v928, 0
  %v931 = vperm.slane %v928, 1
  %v966 = vunpack.c.l.b16 %v896
  %v967 = vunpack.c.h.b16 %v896
  %v968 = vunpack.c.l.b16 %v897
  %v969 = vunpack.c.h.b16 %v897
  %v970 = vunpack.c.l.b16 %v898
  %v971 = vunpack.c.h.b16 %v898
  %v972 = vunpack.c.l.b16 %v899
  %v973 = vunpack.c.h.b16 %v899
  %v974 = vunpack.c.l.b16 %v900
  %v975 = vunpack.c.h.b16 %v900
  %v976 = vunpack.c.l.b16 %v901
  %v977 = vunpack.c.h.b16 %v901
  %v978 = vunpack.c.l.b16 %v902
  %v979 = vunpack.c.h.b16 %v902
  %v980 = vunpack.c.l.b16 %v903
  %v981 = vunpack.c.h.b16 %v903
  %v982 = vunpack.c.l.b16 %v904
  %v983 = vunpack.c.h.b16 %v904
  %v984 = vunpack.c.l.b16 %v905
  %v985 = vunpack.c.h.b16 %v905
  %v986 = vunpack.c.l.b16 %v906
  %v987 = vunpack.c.h.b16 %v906
  %v988 = vunpack.c.l.b16 %v907
  %v989 = vunpack.c.h.b16 %v907
  %v990 = vunpack.c.l.b16 %v908
  %v991 = vunpack.c.h.b16 %v908
  %v992 = vunpack.c.l.b16 %v909
  %v993 = vunpack.c.h.b16 %v909
  %v994 = vunpack.c.l.b16 %v910
  %v995 = vunpack.c.h.b16 %v910
  %v996 = vunpack.c.l.b16 %v911
  %v997 = vunpack.c.h.b16 %v911
  %v998 = vunpack.c.l.b16 %v912
  %v999 = vunpack.c.h.b16 %v912
  %v1000 = vunpack.c.l.b16 %v913
  %v1001 = vunpack.c.h.b16 %v913
  %v1002 = vunpack.c.l.b16 %v914
  %v1003 = vunpack.c.h.b16 %v914
  %v1004 = vunpack.c.l.b16 %v915
  %v1005 = vunpack.c.h.b16 %v915
  %v1006 = vunpack.c.l.b16 %v916
  %v1007 = vunpack.c.h.b16 %v916
  %v1008 = vunpack.c.l.b16 %v917
  %v1009 = vunpack.c.h.b16 %v917
  %v1010 = vunpack.c.l.b16 %v918
  %v1011 = vunpack.c.h.b16 %v918
  %v1012 = vunpack.c.l.b16 %v919
  %v1013 = vunpack.c.h.b16 %v919
  %v1014 = vunpack.c.l.b16 %v920
  %v1015 = vunpack.c.h.b16 %v920
  %v1016 = vunpack.c.l.b16 %v921
  %v1017 = vunpack.c.h.b16 %v921
  %v1018 = vunpack.c.l.b16 %v922
  %v1019 = vunpack.c.h.b16 %v922
  %v1020 = vunpack.c.l.b16 %v923
  %v1021 = vunpack.c.h.b16 %v923
  %v1022 = vunpack.c.l.b16 %v924
  %v1023 = vunpack.c.h.b16 %v924
  %v1024 = vunpack.c.l.b16 %v925
  %v1025 = vunpack.c.h.b16 %v925
  %v1026 = vunpack.c.l.b16 %v926
  %v1027 = vunpack.c.h.b16 %v926
  %v1028 = vunpack.c.l.b16 %v927
  %v1029 = vunpack.c.h.b16 %v927
  %v1030 = vpack.c.b16 %v968, %v966
  %v1031 = vpack.c.b16 %v969, %v967
  %v1032 = vpack.c.b16 %v972, %v970
  %v1033 = vpack.c.b16 %v973, %v971
  %v1034 = vpack.c.b16 %v976, %v974
  %v1035 = vpack.c.b16 %v977, %v975
  %v1036 = vpack.c.b16 %v980, %v978
  %v1037 = vpack.c.b16 %v981, %v979
  %v1038 = vpack.c.b16 %v984, %v982
  %v1039 = vpack.c.b16 %v985, %v983
  %v1040 = vpack.c.b16 %v988, %v986
  %v1041 = vpack.c.b16 %v989, %v987
  %v1042 = vpack.c.b16 %v992, %v990
  %v1043 = vpack.c.b16 %v993, %v991
  %v1044 = vpack.c.b16 %v996, %v994
  %v1045 = vpack.c.b16 %v997, %v995
  %v1046 = vpack.c.b16 %v1000, %v998
  %v1047 = vpack.c.b16 %v1001, %v999
  %v1048 = vpack.c.b16 %v1004, %v1002
  %v1049 = vpack.c.b16 %v1005, %v1003
  %v1050 = vpack.c.b16 %v1008, %v1006
  %v1051 = vpack.c.b16 %v1009, %v1007
  %v1052 = vpack.c.b16 %v1012, %v1010
  %v1053 = vpack.c.b16 %v1013, %v1011
  %v1054 = vpack.c.b16 %v1016, %v1014
  %v1055 = vpack.c.b16 %v1017, %v1015
  %v1056 = vpack.c.b16 %v1020, %v1018
  %v1057 = vpack.c.b16 %v1021, %v1019
  %v1058 = vpack.c.b16 %v1024, %v1022
  %v1059 = vpack.c.b16 %v1025, %v1023
  %v1060 = vpack.c.b16 %v1028, %v1026
  %v1061 = vpack.c.b16 %v1029, %v1027
  %1094 = vmatpush.bf16.msra.mxu0 %v1044
  %1095 = vmatpush.bf16.msra.mxu0 %v1042
  %1096 = vmatpush.bf16.msra.mxu0 %v1040
  %1097 = vmatpush.bf16.msra.mxu0 %v1038
  %1098 = vmatpush.bf16.msra.mxu0 %v1036
  %1099 = vmatpush.bf16.msra.mxu0 %v1034
  %1100 = vmatpush.bf16.msra.mxu0 %v1032
  %1101 = vmatpush.bf16.msra.mxu0 %v1030
  %1102 = vmatmul.bf16.gmra.mxu0 %v894
  %v1103 = vpop.f32.mrf.mxu0
  %v1104 = vadd.f32 %v930, %v1103
  %v1105 = vpop.f32.mrf.mxu0
  %1106 = vdwg.mxu0
  %1107 = vmatpush.bf16.msra.mxu0 %v1060
  %1108 = vmatpush.bf16.msra.mxu0 %v1058
  %1109 = vmatpush.bf16.msra.mxu0 %v1056
  %1110 = vmatpush.bf16.msra.mxu0 %v1054
  %1111 = vmatpush.bf16.msra.mxu0 %v1052
  %1112 = vmatpush.bf16.msra.mxu0 %v1050
  %1113 = vmatpush.bf16.msra.mxu0 %v1048
  %1114 = vmatpush.bf16.msra.mxu0 %v1046
  %1115 = vmatmul.bf16.gmra.mxu0 %v895
  %v1116 = vpop.f32.mrf.mxu0
  %v1117 = vadd.f32 %v1104, %v1116
  %v1118 = vpop.f32.mrf.mxu0
  %1119 = vdwg.mxu0
  %1120 = vmatpush.bf16.msra.mxu0 %v1045
  %1121 = vmatpush.bf16.msra.mxu0 %v1043
  %1122 = vmatpush.bf16.msra.mxu0 %v1041
  %1123 = vmatpush.bf16.msra.mxu0 %v1039
  %1124 = vmatpush.bf16.msra.mxu0 %v1037
  %1125 = vmatpush.bf16.msra.mxu0 %v1035
  %1126 = vmatpush.bf16.msra.mxu0 %v1033
  %1127 = vmatpush.bf16.msra.mxu0 %v1031
  %1128 = vmatmul.bf16.gmra.mxu0 %v894
  %v1129 = vpop.f32.mrf.mxu0
  %v1130 = vadd.f32 %v931, %v1129
  %v1131 = vpop.f32.mrf.mxu0
  %1132 = vdwg.mxu0
  %1133 = vmatpush.bf16.msra.mxu0 %v1061
  %1134 = vmatpush.bf16.msra.mxu0 %v1059
  %1135 = vmatpush.bf16.msra.mxu0 %v1057
  %1136 = vmatpush.bf16.msra.mxu0 %v1055
  %1137 = vmatpush.bf16.msra.mxu0 %v1053
  %1138 = vmatpush.bf16.msra.mxu0 %v1051
  %1139 = vmatpush.bf16.msra.mxu0 %v1049
  %1140 = vmatpush.bf16.msra.mxu0 %v1047
  %1141 = vmatmul.bf16.gmra.mxu0 %v895
  %v1142 = vpop.f32.mrf.mxu0
  %v1143 = vadd.f32 %v1130, %v1142
  %v1144 = vpop.f32.mrf.mxu0
  %1145 = vdwg.mxu0
  %v1146 = vtanh.pop %v1117
  %v1147 = vtanh.pop %v1143
  %v1148 = vld [vmem:[%s9] sm:$0x3]
  %v1150 = vperm.slane %v1148, 0
  %v1151 = vperm.slane %v1148, 1
  %v1154 = vmul.f32 %v1146, %v1150
  %v1155 = vmul.f32 %v1147, %v1151
  %v1156 = vadd.f32 %v1154, %v1155
  %1157 = vadd.xlane.f32.xlu0 %v1156
  %v1158 = vpop.xlane.xlu0 %1157
  %v1159 = vld [vmem:[%s2] sm:$0xff]
  %vm1160 = vcmp.gt.f32.partialorder %v1159, 0.5
  %v1161 = vsel %vm1160, %v1158, -1e+30
  %vm1162 = vcmask 15360
  %v1163 = vsel %vm1162, %v1161, -inf
  %v1164 = vrot.slane %v1163, 4
  %v1165 = vmax.f32 %v1163, %v1164
  %v1166 = vrot.slane %v1165, 2
  %v1167 = vmax.f32 %v1165, %v1166
  %v1168 = vrot.slane %v1167, 1
  %v1169 = vmax.f32 %v1167, %v1168
  %v1170 = vmul.f32 %v1159, %v1169
  %v1171 = vsel %vm1162, %v1170, 0.0
  %1172 = vadd.xlane.f32.xlu0 %v1171
  %v1173 = vpop.xlane.xlu0 %1172
  %v1174 = vsub.f32 %v1158, %v1173
  %v1175 = vmul.f32 %v1174, 1.442695
  %v1176 = vpow.pop %v1175
  %v1177 = vmul.f32 %v1159, %v1176
  %v1178 = vsel %vm1162, %v1177, 0.0
  %v1179 = vrot.slane %v1178, 4
  %v1180 = vadd.f32 %v1178, %v1179
  %v1181 = vrot.slane %v1180, 2
  %v1182 = vadd.f32 %v1180, %v1181
  %v1183 = vrot.slane %v1182, 1
  %v1184 = vadd.f32 %v1182, %v1183
  %v1185 = vmul.f32 %v1159, %v1184
  %v1186 = vsel %vm1162, %v1185, 0.0
  %1187 = vadd.xlane.f32.xlu0 %v1186
  %v1188 = vpop.xlane.xlu0 %1187
  %v1189 = vrcp.pop %v1188
  %v1190 = vmul.f32 %v1176, %v1189
  %v1191 = vld [vmem:[%s1] sm:$0x3]
  %v1192 = vmul.f32 %v1190, %v872
  %v1193 = vmul.f32 %v1190, %v892
  %v1195 = vsel %vm850, %v1191, 0
  %1197 = vmatpush.msra.mxu0 0.0
  %1198 = vmatpush.msra.mxu0 0.0
  %1199 = vmatpush.msra.mxu0 0.0
  %1200 = vmatpush.msra.mxu0 0.0
  %1201 = vmatpush.msra.mxu0 0.0
  %1202 = vmatpush.msra.mxu0 0.0
  %1203 = vmatpush.msra.mxu0 0.0
  %1204 = vmatpush.msra.mxu0 0.0
  %1205 = vmatpush.msra.mxu0 0.0
  %1206 = vmatpush.msra.mxu0 0.0
  %1207 = vmatpush.msra.mxu0 0.0
  %1208 = vmatpush.msra.mxu0 0.0
  %1209 = vmatpush.msra.mxu0 0.0
  %1210 = vmatpush.msra.mxu0 0.0
  %1211 = vmatpush.msra.mxu0 0.0
  %1212 = vmatpush.msra.mxu0 %v1192
  %1213 = vmatmul.f32.gmra.mxu0 %v1195
  %v1214 = vpop.f32.mrf.mxu0
  %v1215 = vadd.f32 0.0, %v1214
  %1216 = vdwg.mxu0
  %1217 = vmatpush.msra.mxu0 0.0
  %1218 = vmatpush.msra.mxu0 0.0
  %1219 = vmatpush.msra.mxu0 0.0
  %1220 = vmatpush.msra.mxu0 0.0
  %1221 = vmatpush.msra.mxu0 0.0
  %1222 = vmatpush.msra.mxu0 0.0
  %1223 = vmatpush.msra.mxu0 0.0
  %1224 = vmatpush.msra.mxu0 0.0
  %1225 = vmatpush.msra.mxu0 0.0
  %1226 = vmatpush.msra.mxu0 0.0
  %1227 = vmatpush.msra.mxu0 0.0
  %1228 = vmatpush.msra.mxu0 0.0
  %1229 = vmatpush.msra.mxu0 0.0
  %1230 = vmatpush.msra.mxu0 0.0
  %1231 = vmatpush.msra.mxu0 0.0
  %1232 = vmatpush.msra.mxu0 %v1193
  %1233 = vmatmul.f32.gmra.mxu0 %v1195
  %v1234 = vpop.f32.mrf.mxu0
  %v1235 = vadd.f32 0.0, %v1234
  %1236 = vdwg.mxu0
  %v1237 = vpack.c.bf16 %v1215, %v1215
  %v1238 = vpack.c.bf16 %v1235, %v1235
  %v1239 = vld [vmem:[%s10] sm:$0xff]
  %v1240 = vld [vmem:[%s10 + $0x8] sm:$0xff]
  %v1241 = vld [vmem:[%s10 + $0x10] sm:$0xff]
  %v1242 = vld [vmem:[%s10 + $0x18] sm:$0xff]
  %v1243 = vld [vmem:[%s10 + $0x20] sm:$0xff]
  %v1244 = vld [vmem:[%s10 + $0x28] sm:$0xff]
  %v1245 = vld [vmem:[%s10 + $0x30] sm:$0xff]
  %v1246 = vld [vmem:[%s10 + $0x38] sm:$0xff]
  %v1247 = vld [vmem:[%s10 + $0x40] sm:$0xff]
  %v1248 = vld [vmem:[%s10 + $0x48] sm:$0xff]
  %v1249 = vld [vmem:[%s10 + $0x50] sm:$0xff]
  %v1250 = vld [vmem:[%s10 + $0x58] sm:$0xff]
  %v1251 = vld [vmem:[%s10 + $0x60] sm:$0xff]
  %v1252 = vld [vmem:[%s10 + $0x68] sm:$0xff]
  %v1253 = vld [vmem:[%s10 + $0x70] sm:$0xff]
  %v1254 = vld [vmem:[%s10 + $0x78] sm:$0xff]
  %v1255 = vld [vmem:[%s10 + $0x80] sm:$0xff]
  %v1256 = vld [vmem:[%s10 + $0x88] sm:$0xff]
  %v1257 = vld [vmem:[%s10 + $0x90] sm:$0xff]
  %v1258 = vld [vmem:[%s10 + $0x98] sm:$0xff]
  %v1259 = vld [vmem:[%s10 + $0xa0] sm:$0xff]
  %v1260 = vld [vmem:[%s10 + $0xa8] sm:$0xff]
  %v1261 = vld [vmem:[%s10 + $0xb0] sm:$0xff]
  %v1262 = vld [vmem:[%s10 + $0xb8] sm:$0xff]
  %v1263 = vld [vmem:[%s10 + $0xc0] sm:$0xff]
  %v1264 = vld [vmem:[%s10 + $0xc8] sm:$0xff]
  %v1265 = vld [vmem:[%s10 + $0xd0] sm:$0xff]
  %v1266 = vld [vmem:[%s10 + $0xd8] sm:$0xff]
  %v1267 = vld [vmem:[%s10 + $0xe0] sm:$0xff]
  %v1268 = vld [vmem:[%s10 + $0xe8] sm:$0xff]
  %v1269 = vld [vmem:[%s10 + $0xf0] sm:$0xff]
  %v1270 = vld [vmem:[%s10 + $0xf8] sm:$0xff]
  %v1271 = vld [vmem:[%s10 + $0x100] sm:$0xff]
  %v1272 = vld [vmem:[%s10 + $0x108] sm:$0xff]
  %v1273 = vld [vmem:[%s10 + $0x110] sm:$0xff]
  %v1274 = vld [vmem:[%s10 + $0x118] sm:$0xff]
  %v1275 = vld [vmem:[%s10 + $0x120] sm:$0xff]
  %v1276 = vld [vmem:[%s10 + $0x128] sm:$0xff]
  %v1277 = vld [vmem:[%s10 + $0x130] sm:$0xff]
  %v1278 = vld [vmem:[%s10 + $0x138] sm:$0xff]
  %v1279 = vld [vmem:[%s10 + $0x140] sm:$0xff]
  %v1280 = vld [vmem:[%s10 + $0x148] sm:$0xff]
  %v1281 = vld [vmem:[%s10 + $0x150] sm:$0xff]
  %v1282 = vld [vmem:[%s10 + $0x158] sm:$0xff]
  %v1283 = vld [vmem:[%s10 + $0x160] sm:$0xff]
  %v1284 = vld [vmem:[%s10 + $0x168] sm:$0xff]
  %v1285 = vld [vmem:[%s10 + $0x170] sm:$0xff]
  %v1286 = vld [vmem:[%s10 + $0x178] sm:$0xff]
  %v1287 = vld [vmem:[%s10 + $0x180] sm:$0xff]
  %v1288 = vld [vmem:[%s10 + $0x188] sm:$0xff]
  %v1289 = vld [vmem:[%s10 + $0x190] sm:$0xff]
  %v1290 = vld [vmem:[%s10 + $0x198] sm:$0xff]
  %v1291 = vld [vmem:[%s10 + $0x1a0] sm:$0xff]
  %v1292 = vld [vmem:[%s10 + $0x1a8] sm:$0xff]
  %v1293 = vld [vmem:[%s10 + $0x1b0] sm:$0xff]
  %v1294 = vld [vmem:[%s10 + $0x1b8] sm:$0xff]
  %v1295 = vld [vmem:[%s10 + $0x1c0] sm:$0xff]
  %v1296 = vld [vmem:[%s10 + $0x1c8] sm:$0xff]
  %v1297 = vld [vmem:[%s10 + $0x1d0] sm:$0xff]
  %v1298 = vld [vmem:[%s10 + $0x1d8] sm:$0xff]
  %v1299 = vld [vmem:[%s10 + $0x1e0] sm:$0xff]
  %v1300 = vld [vmem:[%s10 + $0x1e8] sm:$0xff]
  %v1301 = vld [vmem:[%s10 + $0x1f0] sm:$0xff]
  %v1302 = vld [vmem:[%s10 + $0x1f8] sm:$0xff]
  %v1303 = vld [vmem:[%s11] sm:$0xf]
  %v1305 = vperm.slane %v1303, 0
  %v1306 = vperm.slane %v1303, 1
  %v1307 = vperm.slane %v1303, 2
  %v1308 = vperm.slane %v1303, 3
  %v1377 = vunpack.c.l.b16 %v1239
  %v1378 = vunpack.c.h.b16 %v1239
  %v1379 = vunpack.c.l.b16 %v1240
  %v1380 = vunpack.c.h.b16 %v1240
  %v1381 = vunpack.c.l.b16 %v1241
  %v1382 = vunpack.c.h.b16 %v1241
  %v1383 = vunpack.c.l.b16 %v1242
  %v1384 = vunpack.c.h.b16 %v1242
  %v1385 = vunpack.c.l.b16 %v1243
  %v1386 = vunpack.c.h.b16 %v1243
  %v1387 = vunpack.c.l.b16 %v1244
  %v1388 = vunpack.c.h.b16 %v1244
  %v1389 = vunpack.c.l.b16 %v1245
  %v1390 = vunpack.c.h.b16 %v1245
  %v1391 = vunpack.c.l.b16 %v1246
  %v1392 = vunpack.c.h.b16 %v1246
  %v1393 = vunpack.c.l.b16 %v1247
  %v1394 = vunpack.c.h.b16 %v1247
  %v1395 = vunpack.c.l.b16 %v1248
  %v1396 = vunpack.c.h.b16 %v1248
  %v1397 = vunpack.c.l.b16 %v1249
  %v1398 = vunpack.c.h.b16 %v1249
  %v1399 = vunpack.c.l.b16 %v1250
  %v1400 = vunpack.c.h.b16 %v1250
  %v1401 = vunpack.c.l.b16 %v1251
  %v1402 = vunpack.c.h.b16 %v1251
  %v1403 = vunpack.c.l.b16 %v1252
  %v1404 = vunpack.c.h.b16 %v1252
  %v1405 = vunpack.c.l.b16 %v1253
  %v1406 = vunpack.c.h.b16 %v1253
  %v1407 = vunpack.c.l.b16 %v1254
  %v1408 = vunpack.c.h.b16 %v1254
  %v1409 = vunpack.c.l.b16 %v1255
  %v1410 = vunpack.c.h.b16 %v1255
  %v1411 = vunpack.c.l.b16 %v1256
  %v1412 = vunpack.c.h.b16 %v1256
  %v1413 = vunpack.c.l.b16 %v1257
  %v1414 = vunpack.c.h.b16 %v1257
  %v1415 = vunpack.c.l.b16 %v1258
  %v1416 = vunpack.c.h.b16 %v1258
  %v1417 = vunpack.c.l.b16 %v1259
  %v1418 = vunpack.c.h.b16 %v1259
  %v1419 = vunpack.c.l.b16 %v1260
  %v1420 = vunpack.c.h.b16 %v1260
  %v1421 = vunpack.c.l.b16 %v1261
  %v1422 = vunpack.c.h.b16 %v1261
  %v1423 = vunpack.c.l.b16 %v1262
  %v1424 = vunpack.c.h.b16 %v1262
  %v1425 = vunpack.c.l.b16 %v1263
  %v1426 = vunpack.c.h.b16 %v1263
  %v1427 = vunpack.c.l.b16 %v1264
  %v1428 = vunpack.c.h.b16 %v1264
  %v1429 = vunpack.c.l.b16 %v1265
  %v1430 = vunpack.c.h.b16 %v1265
  %v1431 = vunpack.c.l.b16 %v1266
  %v1432 = vunpack.c.h.b16 %v1266
  %v1433 = vunpack.c.l.b16 %v1267
  %v1434 = vunpack.c.h.b16 %v1267
  %v1435 = vunpack.c.l.b16 %v1268
  %v1436 = vunpack.c.h.b16 %v1268
  %v1437 = vunpack.c.l.b16 %v1269
  %v1438 = vunpack.c.h.b16 %v1269
  %v1439 = vunpack.c.l.b16 %v1270
  %v1440 = vunpack.c.h.b16 %v1270
  %v1441 = vunpack.c.l.b16 %v1271
  %v1442 = vunpack.c.h.b16 %v1271
  %v1443 = vunpack.c.l.b16 %v1272
  %v1444 = vunpack.c.h.b16 %v1272
  %v1445 = vunpack.c.l.b16 %v1273
  %v1446 = vunpack.c.h.b16 %v1273
  %v1447 = vunpack.c.l.b16 %v1274
  %v1448 = vunpack.c.h.b16 %v1274
  %v1449 = vunpack.c.l.b16 %v1275
  %v1450 = vunpack.c.h.b16 %v1275
  %v1451 = vunpack.c.l.b16 %v1276
  %v1452 = vunpack.c.h.b16 %v1276
  %v1453 = vunpack.c.l.b16 %v1277
  %v1454 = vunpack.c.h.b16 %v1277
  %v1455 = vunpack.c.l.b16 %v1278
  %v1456 = vunpack.c.h.b16 %v1278
  %v1457 = vunpack.c.l.b16 %v1279
  %v1458 = vunpack.c.h.b16 %v1279
  %v1459 = vunpack.c.l.b16 %v1280
  %v1460 = vunpack.c.h.b16 %v1280
  %v1461 = vunpack.c.l.b16 %v1281
  %v1462 = vunpack.c.h.b16 %v1281
  %v1463 = vunpack.c.l.b16 %v1282
  %v1464 = vunpack.c.h.b16 %v1282
  %v1465 = vunpack.c.l.b16 %v1283
  %v1466 = vunpack.c.h.b16 %v1283
  %v1467 = vunpack.c.l.b16 %v1284
  %v1468 = vunpack.c.h.b16 %v1284
  %v1469 = vunpack.c.l.b16 %v1285
  %v1470 = vunpack.c.h.b16 %v1285
  %v1471 = vunpack.c.l.b16 %v1286
  %v1472 = vunpack.c.h.b16 %v1286
  %v1473 = vunpack.c.l.b16 %v1287
  %v1474 = vunpack.c.h.b16 %v1287
  %v1475 = vunpack.c.l.b16 %v1288
  %v1476 = vunpack.c.h.b16 %v1288
  %v1477 = vunpack.c.l.b16 %v1289
  %v1478 = vunpack.c.h.b16 %v1289
  %v1479 = vunpack.c.l.b16 %v1290
  %v1480 = vunpack.c.h.b16 %v1290
  %v1481 = vunpack.c.l.b16 %v1291
  %v1482 = vunpack.c.h.b16 %v1291
  %v1483 = vunpack.c.l.b16 %v1292
  %v1484 = vunpack.c.h.b16 %v1292
  %v1485 = vunpack.c.l.b16 %v1293
  %v1486 = vunpack.c.h.b16 %v1293
  %v1487 = vunpack.c.l.b16 %v1294
  %v1488 = vunpack.c.h.b16 %v1294
  %v1489 = vunpack.c.l.b16 %v1295
  %v1490 = vunpack.c.h.b16 %v1295
  %v1491 = vunpack.c.l.b16 %v1296
  %v1492 = vunpack.c.h.b16 %v1296
  %v1493 = vunpack.c.l.b16 %v1297
  %v1494 = vunpack.c.h.b16 %v1297
  %v1495 = vunpack.c.l.b16 %v1298
  %v1496 = vunpack.c.h.b16 %v1298
  %v1497 = vunpack.c.l.b16 %v1299
  %v1498 = vunpack.c.h.b16 %v1299
  %v1499 = vunpack.c.l.b16 %v1300
  %v1500 = vunpack.c.h.b16 %v1300
  %v1501 = vunpack.c.l.b16 %v1301
  %v1502 = vunpack.c.h.b16 %v1301
  %v1503 = vunpack.c.l.b16 %v1302
  %v1504 = vunpack.c.h.b16 %v1302
  %v1505 = vpack.c.b16 %v1381, %v1377
  %v1506 = vpack.c.b16 %v1382, %v1378
  %v1507 = vpack.c.b16 %v1383, %v1379
  %v1508 = vpack.c.b16 %v1384, %v1380
  %v1509 = vpack.c.b16 %v1389, %v1385
  %v1510 = vpack.c.b16 %v1390, %v1386
  %v1511 = vpack.c.b16 %v1391, %v1387
  %v1512 = vpack.c.b16 %v1392, %v1388
  %v1513 = vpack.c.b16 %v1397, %v1393
  %v1514 = vpack.c.b16 %v1398, %v1394
  %v1515 = vpack.c.b16 %v1399, %v1395
  %v1516 = vpack.c.b16 %v1400, %v1396
  %v1517 = vpack.c.b16 %v1405, %v1401
  %v1518 = vpack.c.b16 %v1406, %v1402
  %v1519 = vpack.c.b16 %v1407, %v1403
  %v1520 = vpack.c.b16 %v1408, %v1404
  %v1521 = vpack.c.b16 %v1413, %v1409
  %v1522 = vpack.c.b16 %v1414, %v1410
  %v1523 = vpack.c.b16 %v1415, %v1411
  %v1524 = vpack.c.b16 %v1416, %v1412
  %v1525 = vpack.c.b16 %v1421, %v1417
  %v1526 = vpack.c.b16 %v1422, %v1418
  %v1527 = vpack.c.b16 %v1423, %v1419
  %v1528 = vpack.c.b16 %v1424, %v1420
  %v1529 = vpack.c.b16 %v1429, %v1425
  %v1530 = vpack.c.b16 %v1430, %v1426
  %v1531 = vpack.c.b16 %v1431, %v1427
  %v1532 = vpack.c.b16 %v1432, %v1428
  %v1533 = vpack.c.b16 %v1437, %v1433
  %v1534 = vpack.c.b16 %v1438, %v1434
  %v1535 = vpack.c.b16 %v1439, %v1435
  %v1536 = vpack.c.b16 %v1440, %v1436
  %v1537 = vpack.c.b16 %v1445, %v1441
  %v1538 = vpack.c.b16 %v1446, %v1442
  %v1539 = vpack.c.b16 %v1447, %v1443
  %v1540 = vpack.c.b16 %v1448, %v1444
  %v1541 = vpack.c.b16 %v1453, %v1449
  %v1542 = vpack.c.b16 %v1454, %v1450
  %v1543 = vpack.c.b16 %v1455, %v1451
  %v1544 = vpack.c.b16 %v1456, %v1452
  %v1545 = vpack.c.b16 %v1461, %v1457
  %v1546 = vpack.c.b16 %v1462, %v1458
  %v1547 = vpack.c.b16 %v1463, %v1459
  %v1548 = vpack.c.b16 %v1464, %v1460
  %v1549 = vpack.c.b16 %v1469, %v1465
  %v1550 = vpack.c.b16 %v1470, %v1466
  %v1551 = vpack.c.b16 %v1471, %v1467
  %v1552 = vpack.c.b16 %v1472, %v1468
  %v1553 = vpack.c.b16 %v1477, %v1473
  %v1554 = vpack.c.b16 %v1478, %v1474
  %v1555 = vpack.c.b16 %v1479, %v1475
  %v1556 = vpack.c.b16 %v1480, %v1476
  %v1557 = vpack.c.b16 %v1485, %v1481
  %v1558 = vpack.c.b16 %v1486, %v1482
  %v1559 = vpack.c.b16 %v1487, %v1483
  %v1560 = vpack.c.b16 %v1488, %v1484
  %v1561 = vpack.c.b16 %v1493, %v1489
  %v1562 = vpack.c.b16 %v1494, %v1490
  %v1563 = vpack.c.b16 %v1495, %v1491
  %v1564 = vpack.c.b16 %v1496, %v1492
  %v1565 = vpack.c.b16 %v1501, %v1497
  %v1566 = vpack.c.b16 %v1502, %v1498
  %v1567 = vpack.c.b16 %v1503, %v1499
  %v1568 = vpack.c.b16 %v1504, %v1500
  %1633 = vmatpush.bf16.msra.mxu0 %v1533
  %1634 = vmatpush.bf16.msra.mxu0 %v1529
  %1635 = vmatpush.bf16.msra.mxu0 %v1525
  %1636 = vmatpush.bf16.msra.mxu0 %v1521
  %1637 = vmatpush.bf16.msra.mxu0 %v1517
  %1638 = vmatpush.bf16.msra.mxu0 %v1513
  %1639 = vmatpush.bf16.msra.mxu0 %v1509
  %1640 = vmatpush.bf16.msra.mxu0 %v1505
  %1641 = vmatmul.bf16.gmra.mxu0 %v1237
  %v1642 = vpop.f32.mrf.mxu0
  %v1643 = vadd.f32 %v1305, %v1642
  %v1644 = vpop.f32.mrf.mxu0
  %1645 = vdwg.mxu0
  %1646 = vmatpush.bf16.msra.mxu0 %v1565
  %1647 = vmatpush.bf16.msra.mxu0 %v1561
  %1648 = vmatpush.bf16.msra.mxu0 %v1557
  %1649 = vmatpush.bf16.msra.mxu0 %v1553
  %1650 = vmatpush.bf16.msra.mxu0 %v1549
  %1651 = vmatpush.bf16.msra.mxu0 %v1545
  %1652 = vmatpush.bf16.msra.mxu0 %v1541
  %1653 = vmatpush.bf16.msra.mxu0 %v1537
  %1654 = vmatmul.bf16.gmra.mxu0 %v1238
  %v1655 = vpop.f32.mrf.mxu0
  %v1656 = vadd.f32 %v1643, %v1655
  %v1657 = vpop.f32.mrf.mxu0
  %1658 = vdwg.mxu0
  %1659 = vmatpush.bf16.msra.mxu0 %v1534
  %1660 = vmatpush.bf16.msra.mxu0 %v1530
  %1661 = vmatpush.bf16.msra.mxu0 %v1526
  %1662 = vmatpush.bf16.msra.mxu0 %v1522
  %1663 = vmatpush.bf16.msra.mxu0 %v1518
  %1664 = vmatpush.bf16.msra.mxu0 %v1514
  %1665 = vmatpush.bf16.msra.mxu0 %v1510
  %1666 = vmatpush.bf16.msra.mxu0 %v1506
  %1667 = vmatmul.bf16.gmra.mxu0 %v1237
  %v1668 = vpop.f32.mrf.mxu0
  %v1669 = vadd.f32 %v1306, %v1668
  %v1670 = vpop.f32.mrf.mxu0
  %1671 = vdwg.mxu0
  %1672 = vmatpush.bf16.msra.mxu0 %v1566
  %1673 = vmatpush.bf16.msra.mxu0 %v1562
  %1674 = vmatpush.bf16.msra.mxu0 %v1558
  %1675 = vmatpush.bf16.msra.mxu0 %v1554
  %1676 = vmatpush.bf16.msra.mxu0 %v1550
  %1677 = vmatpush.bf16.msra.mxu0 %v1546
  %1678 = vmatpush.bf16.msra.mxu0 %v1542
  %1679 = vmatpush.bf16.msra.mxu0 %v1538
  %1680 = vmatmul.bf16.gmra.mxu0 %v1238
  %v1681 = vpop.f32.mrf.mxu0
  %v1682 = vadd.f32 %v1669, %v1681
  %v1683 = vpop.f32.mrf.mxu0
  %1684 = vdwg.mxu0
  %1685 = vmatpush.bf16.msra.mxu0 %v1535
  %1686 = vmatpush.bf16.msra.mxu0 %v1531
  %1687 = vmatpush.bf16.msra.mxu0 %v1527
  %1688 = vmatpush.bf16.msra.mxu0 %v1523
  %1689 = vmatpush.bf16.msra.mxu0 %v1519
  %1690 = vmatpush.bf16.msra.mxu0 %v1515
  %1691 = vmatpush.bf16.msra.mxu0 %v1511
  %1692 = vmatpush.bf16.msra.mxu0 %v1507
  %1693 = vmatmul.bf16.gmra.mxu0 %v1237
  %v1694 = vpop.f32.mrf.mxu0
  %v1695 = vadd.f32 %v1307, %v1694
  %v1696 = vpop.f32.mrf.mxu0
  %1697 = vdwg.mxu0
  %1698 = vmatpush.bf16.msra.mxu0 %v1567
  %1699 = vmatpush.bf16.msra.mxu0 %v1563
  %1700 = vmatpush.bf16.msra.mxu0 %v1559
  %1701 = vmatpush.bf16.msra.mxu0 %v1555
  %1702 = vmatpush.bf16.msra.mxu0 %v1551
  %1703 = vmatpush.bf16.msra.mxu0 %v1547
  %1704 = vmatpush.bf16.msra.mxu0 %v1543
  %1705 = vmatpush.bf16.msra.mxu0 %v1539
  %1706 = vmatmul.bf16.gmra.mxu0 %v1238
  %v1707 = vpop.f32.mrf.mxu0
  %v1708 = vadd.f32 %v1695, %v1707
  %v1709 = vpop.f32.mrf.mxu0
  %1710 = vdwg.mxu0
  %1711 = vmatpush.bf16.msra.mxu0 %v1536
  %1712 = vmatpush.bf16.msra.mxu0 %v1532
  %1713 = vmatpush.bf16.msra.mxu0 %v1528
  %1714 = vmatpush.bf16.msra.mxu0 %v1524
  %1715 = vmatpush.bf16.msra.mxu0 %v1520
  %1716 = vmatpush.bf16.msra.mxu0 %v1516
  %1717 = vmatpush.bf16.msra.mxu0 %v1512
  %1718 = vmatpush.bf16.msra.mxu0 %v1508
  %1719 = vmatmul.bf16.gmra.mxu0 %v1237
  %v1720 = vpop.f32.mrf.mxu0
  %v1721 = vadd.f32 %v1308, %v1720
  %v1722 = vpop.f32.mrf.mxu0
  %1723 = vdwg.mxu0
  %1724 = vmatpush.bf16.msra.mxu0 %v1568
  %1725 = vmatpush.bf16.msra.mxu0 %v1564
  %1726 = vmatpush.bf16.msra.mxu0 %v1560
  %1727 = vmatpush.bf16.msra.mxu0 %v1556
  %1728 = vmatpush.bf16.msra.mxu0 %v1552
  %1729 = vmatpush.bf16.msra.mxu0 %v1548
  %1730 = vmatpush.bf16.msra.mxu0 %v1544
  %1731 = vmatpush.bf16.msra.mxu0 %v1540
  %1732 = vmatmul.bf16.gmra.mxu0 %v1238
  %v1733 = vpop.f32.mrf.mxu0
  %v1734 = vadd.f32 %v1721, %v1733
  %v1735 = vpop.f32.mrf.mxu0
  %1736 = vdwg.mxu0
  %v1737 = vmax.f32 %v1656, 0.0
  %v1738 = vmax.f32 %v1682, 0.0
  %v1739 = vmax.f32 %v1708, 0.0
  %v1740 = vmax.f32 %v1734, 0.0
  %v1741 = vld [vmem:[%s12] sm:$0xf]
  %v1743 = vperm.slane %v1741, 0
  %v1744 = vperm.slane %v1741, 1
  %v1745 = vperm.slane %v1741, 2
  %v1746 = vperm.slane %v1741, 3
  %v1751 = vmul.f32 %v1737, %v1743
  %v1752 = vmul.f32 %v1738, %v1744
  %v1753 = vmul.f32 %v1739, %v1745
  %v1754 = vmul.f32 %v1740, %v1746
  %vm1755 = vcmask 1041408
  %v1756 = vsel %vm1755, %v1751, 0.0
  %v1757 = vsel %vm1755, %v1752, 0.0
  %v1758 = vadd.f32 %v1756, %v1757
  %v1759 = vsel %vm1755, %v1753, 0.0
  %v1760 = vadd.f32 %v1758, %v1759
  %v1761 = vsel %vm1755, %v1754, 0.0
  %v1762 = vadd.f32 %v1760, %v1761
  %1763 = vadd.xlane.f32.xlu0 %v1762
  %v1764 = vpop.xlane.xlu0 %1763
  %v1765 = vld [vmem:[#allocation2] sm:$0x1]
  %v1767 = vperm.slane %v1765, 0
  %v1769 = vadd.f32 %v1764, %v1767
  %vm1770 = vcmask 1024
  %1771 = vst.msk [vmem:[%s14] sm:$0x3] %vm1770, %v1769
  // Predicated region
  $region58: #{att_efficient_forward.1} parent=0 // pred_check
    _
  $region59: #{att_efficient_forward.1} parent=0 // pred_check_branch
    %1773 = sbr.rel (0) target = $region61
  $region60: #{att_efficient_forward.1} parent=0 // pred_region
    _
  $region61: #{att_efficient_forward.1} parent=0 // pred_fallthru
    _
  // Predicated region
  $region62: #{att_efficient_forward.1} parent=0 // pred_check
    _
  $region63: #{att_efficient_forward.1} parent=0 // pred_check_branch
    %1775 = sbr.rel (0) target = $region65
  $region64: #{att_efficient_forward.1} parent=0 // pred_region
    _
  $region65: #{att_efficient_forward.1} parent=0 // pred_fallthru
    _

</llo_original>
